<compile_context>
chip_gen: v6e
topology: v6e:2x2x1
jax: 0.10.0
libtpu: 0.0.40
codegen_flags: <defaults>
</compile_context>

<pallas_src>
import functools
import math

import jax
import jax.numpy as jnp
from jax import lax
from jax.experimental import pallas as pl
from jax.experimental.pallas import tpu as pltpu


# 2-D dot_general dimension-number shorthands.
_NN = (((1,), (0,)), ((), ()))   # A @ B
_NT = (((1,), (1,)), ((), ()))   # A @ B^T   (contract last dims)
_TN = (((0,), (0,)), ((), ()))   # A^T @ B   (contract first dims)


def _mhsa_kernel(xq_ref, xk_ref, wq_ref, bq_ref, wkv_ref, bkv_ref,
                 wo_ref, bo_ref, o_ref,
                 qT_sc, m_sc, l_sc, acc_sc,
                 *, num_heads, head_dim):
    """One grid step == (batch b, query tile qi, kv tile ki).

    xq_ref  : (1, TQ, E)   query-tile slice of x        (input dtype)
    xk_ref  : (1, TK, E)   kv-tile slice of x           (input dtype)
    wq_ref  : (E, E)       q weights, rows r = h*Hd+d, pre-scaled by 1/sqrt(Hd)
    bq_ref  : (E, 1)       q bias (pre-scaled)
    wkv_ref : (2E, E)      k/v weights, rows [k rows | v rows]
    bkv_ref : (2E, 1)
    wo_ref  : (E, E)       out-proj weights, rows r = h*Hd+d
    bo_ref  : (1, E)
    o_ref   : (1, TQ, E)
    qT_sc   : (E, TQ)      q^T for the current query tile (input dtype)
    m_sc    : (H, 1, TQ)   running row max   (f32)
    l_sc    : (H, 1, TQ)   running denom     (f32)
    acc_sc  : (H, Hd, TQ)  running ctx^T     (f32)
    """
    H, Hd = num_heads, head_dim
    ki = pl.program_id(2)
    nk = pl.num_programs(2)
    in_dt = xq_ref.dtype
    E = wq_ref.shape[0]

    # ---- New query tile: dense q projection (M=E, N=TQ, K=E) + reset state.
    @pl.when(ki == 0)
    def _():
        xq = xq_ref[0]                                               # (TQ, E)
        qT = lax.dot_general(wq_ref[...], xq, _NT,
                             preferred_element_type=jnp.float32)     # (E, TQ)
        qT = qT + bq_ref[...].astype(jnp.float32)                    # (E, 1) bcast
        qT_sc[...] = qT.astype(in_dt)
        m_sc[...] = jnp.full(m_sc.shape, -jnp.inf, dtype=m_sc.dtype)
        l_sc[...] = jnp.zeros(l_sc.shape, dtype=l_sc.dtype)
        acc_sc[...] = jnp.zeros(acc_sc.shape, dtype=acc_sc.dtype)

    # ---- k/v projection for this kv tile: one dense matmul (M=2E, N=TK, K=E).
    xk = xk_ref[0]                                                   # (TK, E)
    kvT = lax.dot_general(wkv_ref[...], xk, _NT,
                          preferred_element_type=jnp.float32)        # (2E, TK)
    kvT = (kvT + bkv_ref[...].astype(jnp.float32)).astype(in_dt)

    qT = qT_sc[...]                                                  # (E, TQ)

    # ---- Per-head online-softmax update (head slices are sublane slices).
    for h in range(H):
        kT_h = kvT[h * Hd:(h + 1) * Hd]                              # (Hd, TK)
        vT_h = kvT[E + h * Hd:E + (h + 1) * Hd]                      # (Hd, TK)
        qT_h = qT[h * Hd:(h + 1) * Hd]                               # (Hd, TQ)

        # scores^T[j, i] = sum_d k[j, d] * q_scaled[i, d]            (TK, TQ)
        sT = lax.dot_general(kT_h, qT_h, _TN,
                             preferred_element_type=jnp.float32)

        m_prev = m_sc[h]                                             # (1, TQ)
        l_prev = l_sc[h]
        m_cur = jnp.max(sT, axis=0, keepdims=True)                   # (1, TQ)
        m_new = jnp.maximum(m_prev, m_cur)
        alpha = jnp.exp(m_prev - m_new)                              # (1, TQ)
        p = jnp.exp(sT - m_new)                                      # (TK, TQ)

        l_sc[h] = alpha * l_prev + jnp.sum(p, axis=0, keepdims=True)
        # ctx^T (Hd, TQ) += v^T (Hd, TK) @ p (TK, TQ)
        acc_sc[h] = alpha * acc_sc[h] + lax.dot_general(
            vT_h, p.astype(in_dt), _NN,
            preferred_element_type=jnp.float32)
        m_sc[h] = m_new

    # ---- Last kv tile: normalize and apply the dense output projection.
    @pl.when(ki == nk - 1)
    def _():
        inv_l = pl.reciprocal(l_sc[...], approx=True)                # (H, 1, TQ)
        ctxT = (acc_sc[...] * inv_l).astype(in_dt)                   # (H, Hd, TQ)
        ctxT = ctxT.reshape(H * Hd, ctxT.shape[-1])                  # (E, TQ) head collapse
        # out (TQ, E): contracts both h and d at once (K = E).
        out = lax.dot_general(ctxT, wo_ref[...], _TN,
                              preferred_element_type=jnp.float32)
        o_ref[0] = (out + bo_ref[...].astype(jnp.float32)).astype(o_ref.dtype)


def _pick_tile(s, candidates=(1024, 512, 256, 128)):
    """Largest power-of-two-ish tile that divides s; fall back to full s."""
    for t in candidates:
        if s % t == 0:
            return t
    return s


def mhsa_pallas(x, w_qkv, b_qkv, w_out, b_out, *, num_heads):
    """x: (B, S, E); w_qkv: (E, 3E) [in,out]; b_qkv: (3E,); w_out: (E, E) [in,out]; b_out: (E,)."""
    B, S, E = x.shape
    H = num_heads
    Hd = E // H
    assert Hd * H == E
    inv_scale = 1.0 / math.sqrt(Hd)
    dt = x.dtype

    # One-time (trace-time) weight repack into row-major [r = h*Hd + d, e] form.
    # q rows/bias pre-scaled by 1/sqrt(Hd); everything in the input dtype so the
    # MXU runs in bf16 when the model does.
    wq = (w_qkv[:, :E].T * inv_scale).astype(dt)                 # (E, E)
    bq = (b_qkv[:E] * inv_scale).reshape(E, 1).astype(dt)        # (E, 1)
    wkv = w_qkv[:, E:].T.astype(dt)                              # (2E, E)
    bkv = b_qkv[E:].reshape(2 * E, 1).astype(dt)                 # (2E, 1)
    wo = w_out.astype(dt)                                        # (E, E)
    bo = b_out.reshape(1, E).astype(dt)                          # (1, E)

    TQ = _pick_tile(S)
    TK = _pick_tile(S)
    nq, nk = S // TQ, S // TK

    kernel = functools.partial(_mhsa_kernel, num_heads=H, head_dim=Hd)

    itemsize = jnp.dtype(dt).itemsize
    cost = pl.CostEstimate(
        flops=(2 * B * S * E * E                     # q projection
               + 2 * B * nq * S * 2 * E * E          # k/v projection (recomputed per q tile)
               + 2 * 2 * B * S * S * E               # scores + p@v
               + 2 * B * S * E * E),                 # output projection
        transcendentals=B * H * S * S,               # softmax exp
        bytes_accessed=((2 + nq) * B * S * E + 4 * E * E + 4 * E) * itemsize,
    )

    grid_spec = pltpu.PrefetchScalarGridSpec(
        num_scalar_prefetch=0,
        grid=(B, nq, nk),
        in_specs=[
            pl.BlockSpec((1, TQ, E), lambda b, qi, ki: (b, qi, 0)),   # x (query tile)
            pl.BlockSpec((1, TK, E), lambda b, qi, ki: (b, ki, 0)),   # x (kv tile)
            pl.BlockSpec((E, E), lambda b, qi, ki: (0, 0)),           # wq (scaled)
            pl.BlockSpec((E, 1), lambda b, qi, ki: (0, 0)),           # bq (scaled)
            pl.BlockSpec((2 * E, E), lambda b, qi, ki: (0, 0)),       # wkv
            pl.BlockSpec((2 * E, 1), lambda b, qi, ki: (0, 0)),       # bkv
            pl.BlockSpec((E, E), lambda b, qi, ki: (0, 0)),           # wo
            pl.BlockSpec((1, E), lambda b, qi, ki: (0, 0)),           # bo
        ],
        out_specs=pl.BlockSpec((1, TQ, E), lambda b, qi, ki: (b, qi, 0)),
        scratch_shapes=[
            pltpu.VMEM((E, TQ), dt),                  # q^T (current query tile)
            pltpu.VMEM((H, 1, TQ), jnp.float32),      # running max
            pltpu.VMEM((H, 1, TQ), jnp.float32),      # running denom
            pltpu.VMEM((H, Hd, TQ), jnp.float32),     # running ctx^T
        ],
    )

    return pl.pallas_call(
        kernel,
        out_shape=jax.ShapeDtypeStruct((B, S, E), dt),
        grid_spec=grid_spec,
        compiler_params=pltpu.CompilerParams(
            dimension_semantics=("parallel", "parallel", "arbitrary"),
            # 48 MiB: under v7x's 64 MiB physical VMEM, above the 16/32 MiB
            # defaults on v5e/v6e; tiles above are sized to fit this budget.
            vmem_limit_bytes=48 * 1024 * 1024,
        ),
        cost_estimate=cost,
    )(x, x, wq, bq, wkv, bkv, wo, bo)


def mhsa_reference(x, w_qkv, b_qkv, w_out, b_out, *, num_heads):
    """Pure-JAX reference mirroring the PyTorch forward (eval mode)."""
    B, S, E = x.shape
    head_dim = E // num_heads
    scale = math.sqrt(head_dim)

    qkv = x @ w_qkv + b_qkv                                      # (B, S, 3E)
    q, k, v = jnp.split(qkv, 3, axis=-1)

    def to_heads(t):
        return t.reshape(B, S, num_heads, head_dim).transpose(0, 2, 1, 3)

    q, k, v = map(to_heads, (q, k, v))                           # (B, H, S, Hd)
    scores = jnp.einsum("bhqd,bhkd->bhqk", q, k) / scale
    attn = jax.nn.softmax(scores, axis=-1)
    out = jnp.einsum("bhqk,bhkd->bhqd", attn, v)                 # (B, H, S, Hd)
    out = out.transpose(0, 2, 1, 3).reshape(B, S, E)
    return out @ w_out + b_out


if __name__ == "__main__":
    # Small shapes consistent with the module: batch=2, seq=8, embed=32, heads=2.
    B, S, E = 2, 8, 32
    NUM_HEADS = 2

    key = jax.random.PRNGKey(0)
    kx, kw1, kb1, kw2, kb2 = jax.random.split(key, 5)

    x = jax.random.normal(kx, (B, S, E), dtype=jnp.float32)

    # Deterministic parameter init (nn.Linear shapes), stored as [in, out].
    limit1 = 1.0 / math.sqrt(E)
    w_qkv = jax.random.uniform(kw1, (E, 3 * E), minval=-limit1, maxval=limit1,
                               dtype=jnp.float32)
    b_qkv = jax.random.uniform(kb1, (3 * E,), minval=-limit1, maxval=limit1,
                               dtype=jnp.float32)
    w_out = jax.random.uniform(kw2, (E, E), minval=-limit1, maxval=limit1,
                               dtype=jnp.float32)
    b_out = jax.random.uniform(kb2, (E,), minval=-limit1, maxval=limit1,
                               dtype=jnp.float32)

    out = mhsa_pallas(x, w_qkv, b_qkv, w_out, b_out, num_heads=NUM_HEADS)
    out = jax.block_until_ready(out)

    ref = mhsa_reference(x, w_qkv, b_qkv, w_out, b_out, num_heads=NUM_HEADS)
    assert out.shape == (B, S, E)
    # Tolerance covers the EUP approximate reciprocal in the softmax denominator.
    assert jnp.allclose(out, ref, atol=2e-2, rtol=2e-2), "mismatch vs reference"

    print("KERNEL_OK")
</pallas_src>

<mosaic_0001>
module attributes {stable_mosaic.version = 11 : i64} {
  func.func @_mhsa_kernel(%arg0: i32, %arg1: i32, %arg2: i32, %arg3: memref<1x8x32xf32, #tpu.memory_space<vmem>>, %arg4: memref<1x8x32xf32, #tpu.memory_space<vmem>>, %arg5: memref<32x32xf32, #tpu.memory_space<vmem>>, %arg6: memref<32x1xf32, #tpu.memory_space<vmem>>, %arg7: memref<64x32xf32, #tpu.memory_space<vmem>>, %arg8: memref<64x1xf32, #tpu.memory_space<vmem>>, %arg9: memref<32x32xf32, #tpu.memory_space<vmem>>, %arg10: memref<1x32xf32, #tpu.memory_space<vmem>>, %arg11: memref<1x8x32xf32, #tpu.memory_space<vmem>>, %arg12: memref<32x8xf32, #tpu.memory_space<vmem>>, %arg13: memref<2x1x8xf32, #tpu.memory_space<vmem>>, %arg14: memref<2x1x8xf32, #tpu.memory_space<vmem>>, %arg15: memref<2x16x8xf32, #tpu.memory_space<vmem>>) attributes {dimension_semantics = [#tpu.dimension_semantics<parallel>, #tpu.dimension_semantics<parallel>, #tpu.dimension_semantics<arbitrary>], iteration_bounds = array<i64: 2, 1, 1>, scalar_prefetch = 0 : i64, scratch_operands = 4 : i64, tpu.core_type = #tpu.core_type<tc>, window_params = [{transform_indices = @transform_0, window_bounds = array<i64: 1, 8, 32>}, {transform_indices = @transform_1, window_bounds = array<i64: 1, 8, 32>}, {pipeline_mode = #tpu.pipeline_mode<synchronous>, transform_indices = @transform_2, window_bounds = array<i64: 32, 32>}, {pipeline_mode = #tpu.pipeline_mode<synchronous>, transform_indices = @transform_3, window_bounds = array<i64: 32, 1>}, {pipeline_mode = #tpu.pipeline_mode<synchronous>, transform_indices = @transform_4, window_bounds = array<i64: 64, 32>}, {pipeline_mode = #tpu.pipeline_mode<synchronous>, transform_indices = @transform_5, window_bounds = array<i64: 64, 1>}, {pipeline_mode = #tpu.pipeline_mode<synchronous>, transform_indices = @transform_6, window_bounds = array<i64: 32, 32>}, {pipeline_mode = #tpu.pipeline_mode<synchronous>, transform_indices = @transform_7, window_bounds = array<i64: 1, 32>}, {transform_indices = @transform_8, window_bounds = array<i64: 1, 8, 32>}]} {
    %c0_i32 = arith.constant 0 : i32
    %0 = arith.cmpi eq, %arg2, %c0_i32 : i32
    %1 = arith.extui %0 : i1 to i32
    %c0_i32_0 = arith.constant 0 : i32
    %2 = arith.cmpi ne, %1, %c0_i32_0 : i32
    scf.if %2 {
      %c0_54 = arith.constant 0 : index
      %c0_55 = arith.constant 0 : index
      %c0_56 = arith.constant 0 : index
      %84 = vector.load %arg3[%c0_54, %c0_55, %c0_56] : memref<1x8x32xf32, #tpu.memory_space<vmem>>, vector<1x8x32xf32>
      %85 = vector.shape_cast %84 : vector<1x8x32xf32> to vector<8x32xf32>
      %c0_57 = arith.constant 0 : index
      %c0_58 = arith.constant 0 : index
      %86 = vector.load %arg5[%c0_57, %c0_58] : memref<32x32xf32, #tpu.memory_space<vmem>>, vector<32x32xf32>
      %cst_59 = arith.constant dense<0.000000e+00> : vector<32x8xf32>
      %87 = tpu.matmul %86, %85, %cst_59 {dimension_numbers = #tpu.dot_dimension_numbers<[1], [1], [0], [0], [0, 0, 1, 0], [], []>} : vector<32x32xf32>, vector<8x32xf32>, vector<32x8xf32> -> vector<32x8xf32>
      %c0_60 = arith.constant 0 : index
      %c0_61 = arith.constant 0 : index
      %88 = vector.load %arg6[%c0_60, %c0_61] : memref<32x1xf32, #tpu.memory_space<vmem>>, vector<32x1xf32>
      %89 = vector.broadcast %88 : vector<32x1xf32> to vector<32x8xf32>
      %90 = arith.addf %87, %89 : vector<32x8xf32>
      %c0_62 = arith.constant 0 : index
      %c0_63 = arith.constant 0 : index
      %91 = vector.load %arg12[%c0_62, %c0_63] : memref<32x8xf32, #tpu.memory_space<vmem>>, vector<32x8xf32>
      tpu.vector_store %arg12[%c0_62, %c0_63], %90 {strides = array<i32>} : memref<32x8xf32, #tpu.memory_space<vmem>>, vector<32x8xf32>,
      %cst_64 = arith.constant 0xFF800000 : f32
      %92 = vector.broadcast %cst_64 : f32 to vector<2x1x8xf32>
      %c0_65 = arith.constant 0 : index
      %c0_66 = arith.constant 0 : index
      %c0_67 = arith.constant 0 : index
      %93 = vector.load %arg13[%c0_65, %c0_66, %c0_67] : memref<2x1x8xf32, #tpu.memory_space<vmem>>, vector<2x1x8xf32>
      tpu.vector_store %arg13[%c0_65, %c0_66, %c0_67], %92 {strides = array<i32>} : memref<2x1x8xf32, #tpu.memory_space<vmem>>, vector<2x1x8xf32>,
      %cst_68 = arith.constant 0.000000e+00 : f32
      %94 = vector.broadcast %cst_68 : f32 to vector<2x1x8xf32>
      %c0_69 = arith.constant 0 : index
      %c0_70 = arith.constant 0 : index
      %c0_71 = arith.constant 0 : index
      %95 = vector.load %arg14[%c0_69, %c0_70, %c0_71] : memref<2x1x8xf32, #tpu.memory_space<vmem>>, vector<2x1x8xf32>
      tpu.vector_store %arg14[%c0_69, %c0_70, %c0_71], %94 {strides = array<i32>} : memref<2x1x8xf32, #tpu.memory_space<vmem>>, vector<2x1x8xf32>,
      %cst_72 = arith.constant 0.000000e+00 : f32
      %96 = vector.broadcast %cst_72 : f32 to vector<2x16x8xf32>
      %c0_73 = arith.constant 0 : index
      %c0_74 = arith.constant 0 : index
      %c0_75 = arith.constant 0 : index
      %97 = vector.load %arg15[%c0_73, %c0_74, %c0_75] : memref<2x16x8xf32, #tpu.memory_space<vmem>>, vector<2x16x8xf32>
      tpu.vector_store %arg15[%c0_73, %c0_74, %c0_75], %96 {strides = array<i32>} : memref<2x16x8xf32, #tpu.memory_space<vmem>>, vector<2x16x8xf32>,
    } else {
    }
    %c0 = arith.constant 0 : index
    %c0_1 = arith.constant 0 : index
    %c0_2 = arith.constant 0 : index
    %3 = vector.load %arg4[%c0, %c0_1, %c0_2] : memref<1x8x32xf32, #tpu.memory_space<vmem>>, vector<1x8x32xf32>
    %4 = vector.shape_cast %3 : vector<1x8x32xf32> to vector<8x32xf32>
    %c0_3 = arith.constant 0 : index
    %c0_4 = arith.constant 0 : index
    %5 = vector.load %arg7[%c0_3, %c0_4] : memref<64x32xf32, #tpu.memory_space<vmem>>, vector<64x32xf32>
    %cst = arith.constant dense<0.000000e+00> : vector<64x8xf32>
    %6 = tpu.matmul %5, %4, %cst {dimension_numbers = #tpu.dot_dimension_numbers<[1], [1], [0], [0], [0, 0, 1, 0], [], []>} : vector<64x32xf32>, vector<8x32xf32>, vector<64x8xf32> -> vector<64x8xf32>
    %c0_5 = arith.constant 0 : index
    %c0_6 = arith.constant 0 : index
    %7 = vector.load %arg8[%c0_5, %c0_6] : memref<64x1xf32, #tpu.memory_space<vmem>>, vector<64x1xf32>
    %8 = vector.broadcast %7 : vector<64x1xf32> to vector<64x8xf32>
    %9 = arith.addf %6, %8 : vector<64x8xf32>
    %c0_7 = arith.constant 0 : index
    %c0_8 = arith.constant 0 : index
    %10 = vector.load %arg12[%c0_7, %c0_8] : memref<32x8xf32, #tpu.memory_space<vmem>>, vector<32x8xf32>
    %11 = vector.extract_strided_slice %9 {offsets = [0, 0], sizes = [16, 8], strides = [1, 1]} : vector<64x8xf32> to vector<16x8xf32>
    %12 = vector.extract_strided_slice %9 {offsets = [32, 0], sizes = [16, 8], strides = [1, 1]} : vector<64x8xf32> to vector<16x8xf32>
    %13 = vector.extract_strided_slice %10 {offsets = [0, 0], sizes = [16, 8], strides = [1, 1]} : vector<32x8xf32> to vector<16x8xf32>
    %cst_9 = arith.constant dense<0.000000e+00> : vector<8x8xf32>
    %14 = tpu.matmul %11, %13, %cst_9 {dimension_numbers = #tpu.dot_dimension_numbers<[0], [0], [1], [1], [0, 1, 1, 1], [], []>} : vector<16x8xf32>, vector<16x8xf32>, vector<8x8xf32> -> vector<8x8xf32>
    %c0_10 = arith.constant 0 : index
    %c0_11 = arith.constant 0 : index
    %c0_12 = arith.constant 0 : index
    %15 = vector.load %arg13[%c0_10, %c0_11, %c0_12] : memref<2x1x8xf32, #tpu.memory_space<vmem>>, vector<1x1x8xf32>
    %16 = vector.shape_cast %15 : vector<1x1x8xf32> to vector<1x8xf32>
    %c0_13 = arith.constant 0 : index
    %c0_14 = arith.constant 0 : index
    %c0_15 = arith.constant 0 : index
    %17 = vector.load %arg14[%c0_13, %c0_14, %c0_15] : memref<2x1x8xf32, #tpu.memory_space<vmem>>, vector<1x1x8xf32>
    %18 = vector.shape_cast %17 : vector<1x1x8xf32> to vector<1x8xf32>
    %cst_16 = arith.constant dense<0xFF800000> : vector<8xf32>
    %19 = vector.multi_reduction <maximumf>, %14, %cst_16 [0] : vector<8x8xf32> to vector<8xf32>
    %20 = vector.shape_cast %19 : vector<8xf32> to vector<1x8xf32>
    %21 = arith.maximumf %16, %20 : vector<1x8xf32>
    %22 = arith.subf %16, %21 : vector<1x8xf32>
    %23 = math.exp %22 : vector<1x8xf32>
    %24 = vector.broadcast %21 : vector<1x8xf32> to vector<8x8xf32>
    %25 = arith.subf %14, %24 : vector<8x8xf32>
    %26 = math.exp %25 : vector<8x8xf32>
    %27 = arith.mulf %23, %18 : vector<1x8xf32>
    %cst_17 = arith.constant dense<0.000000e+00> : vector<8xf32>
    %28 = vector.multi_reduction <add>, %26, %cst_17 [0] : vector<8x8xf32> to vector<8xf32>
    %29 = vector.shape_cast %28 : vector<8xf32> to vector<1x8xf32>
    %30 = arith.addf %27, %29 : vector<1x8xf32>
    %c0_18 = arith.constant 0 : index
    %c0_19 = arith.constant 0 : index
    %c0_20 = arith.constant 0 : index
    %31 = vector.load %arg14[%c0_18, %c0_19, %c0_20] : memref<2x1x8xf32, #tpu.memory_space<vmem>>, vector<1x1x8xf32>
    %32 = vector.shape_cast %31 : vector<1x1x8xf32> to vector<1x8xf32>
    %33 = vector.shape_cast %30 : vector<1x8xf32> to vector<1x1x8xf32>
    tpu.vector_store %arg14[%c0_18, %c0_19, %c0_20], %33 {strides = array<i32>} : memref<2x1x8xf32, #tpu.memory_space<vmem>>, vector<1x1x8xf32>,
    %c0_21 = arith.constant 0 : index
    %c0_22 = arith.constant 0 : index
    %c0_23 = arith.constant 0 : index
    %34 = vector.load %arg15[%c0_21, %c0_22, %c0_23] : memref<2x16x8xf32, #tpu.memory_space<vmem>>, vector<1x16x8xf32>
    %35 = vector.shape_cast %34 : vector<1x16x8xf32> to vector<16x8xf32>
    %36 = vector.broadcast %23 : vector<1x8xf32> to vector<16x8xf32>
    %37 = arith.mulf %36, %35 : vector<16x8xf32>
    %cst_24 = arith.constant dense<0.000000e+00> : vector<16x8xf32>
    %38 = tpu.matmul %12, %26, %cst_24 {dimension_numbers = #tpu.dot_dimension_numbers<[1], [0], [0], [1], [0, 0, 1, 1], [], []>} : vector<16x8xf32>, vector<8x8xf32>, vector<16x8xf32> -> vector<16x8xf32>
    %39 = arith.addf %37, %38 : vector<16x8xf32>
    %c0_25 = arith.constant 0 : index
    %c0_26 = arith.constant 0 : index
    %c0_27 = arith.constant 0 : index
    %40 = vector.load %arg15[%c0_25, %c0_26, %c0_27] : memref<2x16x8xf32, #tpu.memory_space<vmem>>, vector<1x16x8xf32>
    %41 = vector.shape_cast %40 : vector<1x16x8xf32> to vector<16x8xf32>
    %42 = vector.shape_cast %39 : vector<16x8xf32> to vector<1x16x8xf32>
    tpu.vector_store %arg15[%c0_25, %c0_26, %c0_27], %42 {strides = array<i32>} : memref<2x16x8xf32, #tpu.memory_space<vmem>>, vector<1x16x8xf32>,
    %c0_28 = arith.constant 0 : index
    %c0_29 = arith.constant 0 : index
    %c0_30 = arith.constant 0 : index
    %43 = vector.load %arg13[%c0_28, %c0_29, %c0_30] : memref<2x1x8xf32, #tpu.memory_space<vmem>>, vector<1x1x8xf32>
    %44 = vector.shape_cast %43 : vector<1x1x8xf32> to vector<1x8xf32>
    %45 = vector.shape_cast %21 : vector<1x8xf32> to vector<1x1x8xf32>
    tpu.vector_store %arg13[%c0_28, %c0_29, %c0_30], %45 {strides = array<i32>} : memref<2x1x8xf32, #tpu.memory_space<vmem>>, vector<1x1x8xf32>,
    %46 = vector.extract_strided_slice %9 {offsets = [16, 0], sizes = [16, 8], strides = [1, 1]} : vector<64x8xf32> to vector<16x8xf32>
    %47 = vector.extract_strided_slice %9 {offsets = [48, 0], sizes = [16, 8], strides = [1, 1]} : vector<64x8xf32> to vector<16x8xf32>
    %48 = vector.extract_strided_slice %10 {offsets = [16, 0], sizes = [16, 8], strides = [1, 1]} : vector<32x8xf32> to vector<16x8xf32>
    %cst_31 = arith.constant dense<0.000000e+00> : vector<8x8xf32>
    %49 = tpu.matmul %46, %48, %cst_31 {dimension_numbers = #tpu.dot_dimension_numbers<[0], [0], [1], [1], [0, 1, 1, 1], [], []>} : vector<16x8xf32>, vector<16x8xf32>, vector<8x8xf32> -> vector<8x8xf32>
    %c1 = arith.constant 1 : index
    %c0_32 = arith.constant 0 : index
    %c0_33 = arith.constant 0 : index
    %50 = vector.load %arg13[%c1, %c0_32, %c0_33] : memref<2x1x8xf32, #tpu.memory_space<vmem>>, vector<1x1x8xf32>
    %51 = vector.shape_cast %50 : vector<1x1x8xf32> to vector<1x8xf32>
    %c1_34 = arith.constant 1 : index
    %c0_35 = arith.constant 0 : index
    %c0_36 = arith.constant 0 : index
    %52 = vector.load %arg14[%c1_34, %c0_35, %c0_36] : memref<2x1x8xf32, #tpu.memory_space<vmem>>, vector<1x1x8xf32>
    %53 = vector.shape_cast %52 : vector<1x1x8xf32> to vector<1x8xf32>
    %cst_37 = arith.constant dense<0xFF800000> : vector<8xf32>
    %54 = vector.multi_reduction <maximumf>, %49, %cst_37 [0] : vector<8x8xf32> to vector<8xf32>
    %55 = vector.shape_cast %54 : vector<8xf32> to vector<1x8xf32>
    %56 = arith.maximumf %51, %55 : vector<1x8xf32>
    %57 = arith.subf %51, %56 : vector<1x8xf32>
    %58 = math.exp %57 : vector<1x8xf32>
    %59 = vector.broadcast %56 : vector<1x8xf32> to vector<8x8xf32>
    %60 = arith.subf %49, %59 : vector<8x8xf32>
    %61 = math.exp %60 : vector<8x8xf32>
    %62 = arith.mulf %58, %53 : vector<1x8xf32>
    %cst_38 = arith.constant dense<0.000000e+00> : vector<8xf32>
    %63 = vector.multi_reduction <add>, %61, %cst_38 [0] : vector<8x8xf32> to vector<8xf32>
    %64 = vector.shape_cast %63 : vector<8xf32> to vector<1x8xf32>
    %65 = arith.addf %62, %64 : vector<1x8xf32>
    %c1_39 = arith.constant 1 : index
    %c0_40 = arith.constant 0 : index
    %c0_41 = arith.constant 0 : index
    %66 = vector.load %arg14[%c1_39, %c0_40, %c0_41] : memref<2x1x8xf32, #tpu.memory_space<vmem>>, vector<1x1x8xf32>
    %67 = vector.shape_cast %66 : vector<1x1x8xf32> to vector<1x8xf32>
    %68 = vector.shape_cast %65 : vector<1x8xf32> to vector<1x1x8xf32>
    tpu.vector_store %arg14[%c1_39, %c0_40, %c0_41], %68 {strides = array<i32>} : memref<2x1x8xf32, #tpu.memory_space<vmem>>, vector<1x1x8xf32>,
    %c1_42 = arith.constant 1 : index
    %c0_43 = arith.constant 0 : index
    %c0_44 = arith.constant 0 : index
    %69 = vector.load %arg15[%c1_42, %c0_43, %c0_44] : memref<2x16x8xf32, #tpu.memory_space<vmem>>, vector<1x16x8xf32>
    %70 = vector.shape_cast %69 : vector<1x16x8xf32> to vector<16x8xf32>
    %71 = vector.broadcast %58 : vector<1x8xf32> to vector<16x8xf32>
    %72 = arith.mulf %71, %70 : vector<16x8xf32>
    %cst_45 = arith.constant dense<0.000000e+00> : vector<16x8xf32>
    %73 = tpu.matmul %47, %61, %cst_45 {dimension_numbers = #tpu.dot_dimension_numbers<[1], [0], [0], [1], [0, 0, 1, 1], [], []>} : vector<16x8xf32>, vector<8x8xf32>, vector<16x8xf32> -> vector<16x8xf32>
    %74 = arith.addf %72, %73 : vector<16x8xf32>
    %c1_46 = arith.constant 1 : index
    %c0_47 = arith.constant 0 : index
    %c0_48 = arith.constant 0 : index
    %75 = vector.load %arg15[%c1_46, %c0_47, %c0_48] : memref<2x16x8xf32, #tpu.memory_space<vmem>>, vector<1x16x8xf32>
    %76 = vector.shape_cast %75 : vector<1x16x8xf32> to vector<16x8xf32>
    %77 = vector.shape_cast %74 : vector<16x8xf32> to vector<1x16x8xf32>
    tpu.vector_store %arg15[%c1_46, %c0_47, %c0_48], %77 {strides = array<i32>} : memref<2x16x8xf32, #tpu.memory_space<vmem>>, vector<1x16x8xf32>,
    %c1_49 = arith.constant 1 : index
    %c0_50 = arith.constant 0 : index
    %c0_51 = arith.constant 0 : index
    %78 = vector.load %arg13[%c1_49, %c0_50, %c0_51] : memref<2x1x8xf32, #tpu.memory_space<vmem>>, vector<1x1x8xf32>
    %79 = vector.shape_cast %78 : vector<1x1x8xf32> to vector<1x8xf32>
    %80 = vector.shape_cast %56 : vector<1x8xf32> to vector<1x1x8xf32>
    tpu.vector_store %arg13[%c1_49, %c0_50, %c0_51], %80 {strides = array<i32>} : memref<2x1x8xf32, #tpu.memory_space<vmem>>, vector<1x1x8xf32>,
    %c0_i32_52 = arith.constant 0 : i32
    %81 = arith.cmpi eq, %arg2, %c0_i32_52 : i32
    %82 = arith.extui %81 : i1 to i32
    %c0_i32_53 = arith.constant 0 : i32
    %83 = arith.cmpi ne, %82, %c0_i32_53 : i32
    scf.if %83 {
      %c0_54 = arith.constant 0 : index
      %c0_55 = arith.constant 0 : index
      %c0_56 = arith.constant 0 : index
      %84 = vector.load %arg14[%c0_54, %c0_55, %c0_56] : memref<2x1x8xf32, #tpu.memory_space<vmem>>, vector<2x1x8xf32>
      %85 = tpu.reciprocal %84 {approx = true} : vector<2x1x8xf32> -> vector<2x1x8xf32>
      %c0_57 = arith.constant 0 : index
      %c0_58 = arith.constant 0 : index
      %c0_59 = arith.constant 0 : index
      %86 = vector.load %arg15[%c0_57, %c0_58, %c0_59] : memref<2x16x8xf32, #tpu.memory_space<vmem>>, vector<2x16x8xf32>
      %87 = vector.broadcast %85 : vector<2x1x8xf32> to vector<2x16x8xf32>
      %88 = arith.mulf %86, %87 : vector<2x16x8xf32>
      %89 = vector.shape_cast %88 : vector<2x16x8xf32> to vector<32x8xf32>
      %c0_60 = arith.constant 0 : index
      %c0_61 = arith.constant 0 : index
      %90 = vector.load %arg9[%c0_60, %c0_61] : memref<32x32xf32, #tpu.memory_space<vmem>>, vector<32x32xf32>
      %cst_62 = arith.constant dense<0.000000e+00> : vector<8x32xf32>
      %91 = tpu.matmul %89, %90, %cst_62 {dimension_numbers = #tpu.dot_dimension_numbers<[0], [0], [1], [1], [0, 1, 1, 1], [], []>} : vector<32x8xf32>, vector<32x32xf32>, vector<8x32xf32> -> vector<8x32xf32>
      %c0_63 = arith.constant 0 : index
      %c0_64 = arith.constant 0 : index
      %92 = vector.load %arg10[%c0_63, %c0_64] : memref<1x32xf32, #tpu.memory_space<vmem>>, vector<1x32xf32>
      %93 = vector.broadcast %92 : vector<1x32xf32> to vector<8x32xf32>
      %94 = arith.addf %91, %93 : vector<8x32xf32>
      %c0_65 = arith.constant 0 : index
      %c0_66 = arith.constant 0 : index
      %c0_67 = arith.constant 0 : index
      %95 = vector.load %arg11[%c0_65, %c0_66, %c0_67] : memref<1x8x32xf32, #tpu.memory_space<vmem>>, vector<1x8x32xf32>
      %96 = vector.shape_cast %95 : vector<1x8x32xf32> to vector<8x32xf32>
      %97 = vector.shape_cast %94 : vector<8x32xf32> to vector<1x8x32xf32>
      tpu.vector_store %arg11[%c0_65, %c0_66, %c0_67], %97 {strides = array<i32>} : memref<1x8x32xf32, #tpu.memory_space<vmem>>, vector<1x8x32xf32>,
    } else {
    }
    return
  }
  func.func @transform_0(%arg0: i32, %arg1: i32, %arg2: i32) -> (i32, i32, i32) {
    %c0_i32 = arith.constant 0 : i32
    %c0_i32_0 = arith.constant 0 : i32
    return %arg0, %arg1, %c0_i32 : i32, i32, i32
  }
  func.func @transform_1(%arg0: i32, %arg1: i32, %arg2: i32) -> (i32, i32, i32) {
    %c0_i32 = arith.constant 0 : i32
    %c0_i32_0 = arith.constant 0 : i32
    return %arg0, %arg2, %c0_i32 : i32, i32, i32
  }
  func.func @transform_2(%arg0: i32, %arg1: i32, %arg2: i32) -> (i32, i32) {
    %c0_i32 = arith.constant 0 : i32
    %c0_i32_0 = arith.constant 0 : i32
    %c0_i32_1 = arith.constant 0 : i32
    return %c0_i32, %c0_i32_0 : i32, i32
  }
  func.func @transform_3(%arg0: i32, %arg1: i32, %arg2: i32) -> (i32, i32) {
    %c0_i32 = arith.constant 0 : i32
    %c0_i32_0 = arith.constant 0 : i32
    %c0_i32_1 = arith.constant 0 : i32
    return %c0_i32, %c0_i32_0 : i32, i32
  }
  func.func @transform_4(%arg0: i32, %arg1: i32, %arg2: i32) -> (i32, i32) {
    %c0_i32 = arith.constant 0 : i32
    %c0_i32_0 = arith.constant 0 : i32
    %c0_i32_1 = arith.constant 0 : i32
    return %c0_i32, %c0_i32_0 : i32, i32
  }
  func.func @transform_5(%arg0: i32, %arg1: i32, %arg2: i32) -> (i32, i32) {
    %c0_i32 = arith.constant 0 : i32
    %c0_i32_0 = arith.constant 0 : i32
    %c0_i32_1 = arith.constant 0 : i32
    return %c0_i32, %c0_i32_0 : i32, i32
  }
  func.func @transform_6(%arg0: i32, %arg1: i32, %arg2: i32) -> (i32, i32) {
    %c0_i32 = arith.constant 0 : i32
    %c0_i32_0 = arith.constant 0 : i32
    %c0_i32_1 = arith.constant 0 : i32
    return %c0_i32, %c0_i32_0 : i32, i32
  }
  func.func @transform_7(%arg0: i32, %arg1: i32, %arg2: i32) -> (i32, i32) {
    %c0_i32 = arith.constant 0 : i32
    %c0_i32_0 = arith.constant 0 : i32
    %c0_i32_1 = arith.constant 0 : i32
    return %c0_i32, %c0_i32_0 : i32, i32
  }
  func.func @transform_8(%arg0: i32, %arg1: i32, %arg2: i32) -> (i32, i32, i32) {
    %c0_i32 = arith.constant 0 : i32
    %c0_i32_0 = arith.constant 0 : i32
    return %arg0, %arg1, %c0_i32 : i32, i32, i32
  }
}

</mosaic_0001>

<llo_original>
// kernel: tpu_custom_call.1
$region0: #{tpu_custom_call.1}
  #allocation0 [shape = 'u32[]', space=smem, size = 0x4, offset = 0x4, fixed_abs, tag = 'smem constant byte address 0x4 - core index']
  #allocation1 [shape = 'u32[144,128]{1,0:T(1,128)}', space=vmem, size = 0x12000, scoped, tag = 'internal scratch']
  #allocation2 [shape = 'f32[32,8]{1,0:T(8,128)}', space=vmem, size = 0x4000, scoped, tag = 'scratch operand']
  #allocation3 [shape = 'f32[2,1,8]{2,1,0:T(1,128)}', space=vmem, size = 0x400, scoped, tag = 'scratch operand']
  #allocation4 [shape = 'f32[2,1,8]{2,1,0:T(1,128)}', space=vmem, size = 0x400, scoped, tag = 'scratch operand']
  #allocation5 [shape = 'f32[2,16,8]{2,1,0:T(8,128)}', space=vmem, size = 0x4000, scoped, tag = 'scratch operand']
  %s0 = inlined_call_operand.vmem [shape: f32[2,8,32], index: 0, kind: input, shape index: {}]
  %s1 = inlined_call_operand.vmem [shape: f32[2,8,32], index: 1, kind: input, shape index: {}]
  %s2 = inlined_call_operand.vmem [shape: f32[32,32], index: 2, kind: input, shape index: {}]
  %s3 = inlined_call_operand.vmem [shape: f32[32,1], index: 3, kind: input, shape index: {}]
  %s4 = inlined_call_operand.vmem [shape: f32[64,32], index: 4, kind: input, shape index: {}]
  %s5 = inlined_call_operand.vmem [shape: f32[64,1], index: 5, kind: input, shape index: {}]
  %s6 = inlined_call_operand.vmem [shape: f32[32,32], index: 6, kind: input, shape index: {}]
  %s7 = inlined_call_operand.vmem [shape: f32[1,32], index: 7, kind: input, shape index: {}]
  %s8 = inlined_call_operand.hbm [shape: f32[2,8,32], index: 8, kind: output, shape index: {}]
  %s9 = sld [smem:[#allocation0]]
  $region73: #{tpu_custom_call.1} parent=0
    _
  %s11 = ssub.s32 1, %s9
  %s12 = scalar_select 0, %s11, %s9
  $region1: #{tpu_custom_call.1} parent=0
    #allocation6 [shape = 'u8[8192]{0}', space=vmem, size = 0x2000, scoped, tag = 'output window, operand 0']
    #allocation7 [shape = 's32[2]{0}', space=sflag, size = 0x8, scoped, tag = 'scoped memory for tpu_custom_call.1']
    %13 = vsyncpa [#allocation7], 0
    %s14 = scalar_lea.sflag [#allocation7], 1
    %15 = vsyncpa %s14, 0
    loop: start=0, step=1, limit=4
    $region2: #{tpu_custom_call.1} parent=1 // loop_pre_header
      _
    $region3: #{tpu_custom_call.1} parent=1 // loop_header
      %s17 = sphi 0, %s21
      %p18 = scmp.ge.s32.totalorder %s17, 4
      %s24 = sphi 0, %s43
      %s25 = sphi 0, %s39
      %s26 = sphi 0, %s35
      %s27 = sphi 0, %s24
      %s28 = sphi 0, %s25
      %s29 = sphi 0, %s26
      %s30 = sphi 0, %s27
      %s31 = sphi 0, %s28
      %s32 = sphi 0, %s29
      %s48 = sphi 0, %s50
      %s51 = sphi 0, %s48
      %s52 = sphi 0, %s51
      %s68 = sphi 0, %s52
      %s76 = sphi 0, %s78
      %s79 = sphi 0, %s76
      %s80 = sphi 0, %s79
      %s96 = sphi 0, %s80
      %s100 = sphi 0, %s100
      %s102 = sphi 0, %s100
      %s103 = sphi 0, %s102
      %s117 = sphi 0, %s103
      %s121 = sphi 0, %s121
      %s123 = sphi 0, %s121
      %s124 = sphi 0, %s123
      %s138 = sphi 0, %s124
      %s142 = sphi 0, %s142
      %s144 = sphi 0, %s142
      %s145 = sphi 0, %s144
      %s159 = sphi 0, %s145
      %s163 = sphi 0, %s163
      %s165 = sphi 0, %s163
      %s166 = sphi 0, %s165
      %s180 = sphi 0, %s166
      %s184 = sphi 0, %s184
      %s186 = sphi 0, %s184
      %s187 = sphi 0, %s186
      %s201 = sphi 0, %s187
      %s205 = sphi 0, %s205
      %s207 = sphi 0, %s205
      %s208 = sphi 0, %s207
      %s222 = sphi 0, %s208
      %s230 = sphi 0, %s232
      %s233 = sphi 0, %s230
      %s234 = sphi 0, %s233
      %s250 = sphi 0, %s234
    $region4: #{tpu_custom_call.1} parent=1 // loop_header_branch
      %20 = sbr.rel (%p18) target = $region8
    $region5: #{tpu_custom_call.1} parent=1 // loop_body
      %s22 = ssub.s32 %s17, 1
      %s23 = ssub.s32 %s17, 2
      %s33 = sadd.s32 1, %s26
      %p34 = scmp.ge.s32.totalorder %s33, 1
      %s35 = scalar_select %p34, 0, %s33
      %s36 = sadd.s32 1, %s25
      %s37 = scalar_select %p34, %s36, %s25
      %p38 = scmp.ge.s32.totalorder %s37, 1
      %s39 = scalar_select %p38, 0, %s37
      %s40 = sadd.s32 1, %s24
      %s41 = scalar_select %p38, %s40, %s24
      %p42 = scmp.ge.s32.totalorder %s41, 2
      %s43 = scalar_select %p42, 0, %s41
      %s44 = ssub.s32 %s24, %s43
      %s45 = ssub.s32 %s25, %s39
      %s46 = sor.u32 %s44, %s45
      %p47 = scmp.eq.s32.totalorder %s46, 0
      %s49 = sadd.s32 %s48, 1
      %s50 = scalar_select %p47, %s48, %s49
      %p53 = pneg %p47
      %p54 = scmp.eq.s32.totalorder %s17, 1
      %p55 = por %p53, %p54
      %p56 = scmp.ne.s32.totalorder %s48, %s51
      %p57 = scmp.eq.s32.totalorder %s17, 0
      %p58 = por %p56, %p57
      %p59 = scmp.ne.s32.totalorder %s48, %s51
      %p60 = scmp.eq.s32.totalorder %s22, 1
      %p61 = por %p59, %p60
      %p62 = scmp.ne.s32.totalorder %s51, %s52
      %p63 = scmp.eq.s32.totalorder %s22, 0
      %p64 = por %p62, %p63
      %p65 = scmp.ne.s32.totalorder %s51, %s52
      %p66 = scmp.eq.s32.totalorder %s23, 1
      %p67 = por %p65, %p66
      %p69 = scmp.ne.s32.totalorder %s52, %s68
      %p70 = scmp.eq.s32.totalorder %s23, 0
      %p71 = por %p69, %p70
      %s72 = ssub.s32 %s24, %s43
      %s73 = ssub.s32 %s26, %s35
      %s74 = sor.u32 %s72, %s73
      %p75 = scmp.eq.s32.totalorder %s74, 0
      %s77 = sadd.s32 %s76, 1
      %s78 = scalar_select %p75, %s76, %s77
      %p81 = pneg %p75
      %p82 = scmp.eq.s32.totalorder %s17, 1
      %p83 = por %p81, %p82
      %p84 = scmp.ne.s32.totalorder %s76, %s79
      %p85 = scmp.eq.s32.totalorder %s17, 0
      %p86 = por %p84, %p85
      %p87 = scmp.ne.s32.totalorder %s76, %s79
      %p88 = scmp.eq.s32.totalorder %s22, 1
      %p89 = por %p87, %p88
      %p90 = scmp.ne.s32.totalorder %s79, %s80
      %p91 = scmp.eq.s32.totalorder %s22, 0
      %p92 = por %p90, %p91
      %p93 = scmp.ne.s32.totalorder %s79, %s80
      %p94 = scmp.eq.s32.totalorder %s23, 1
      %p95 = por %p93, %p94
      %p97 = scmp.ne.s32.totalorder %s80, %s96
      %p98 = scmp.eq.s32.totalorder %s23, 0
      %p99 = por %p97, %p98
      %s101 = sadd.s32 %s100, 1
      %p104 = scmp.eq.s32.totalorder %s17, 1
      %p105 = scmp.ne.s32.totalorder %s100, %s102
      %p106 = scmp.eq.s32.totalorder %s17, 0
      %p107 = por %p105, %p106
      %p108 = scmp.ne.s32.totalorder %s100, %s102
      %p109 = scmp.eq.s32.totalorder %s22, 1
      %p110 = por %p108, %p109
      %p111 = scmp.ne.s32.totalorder %s102, %s103
      %p112 = scmp.eq.s32.totalorder %s22, 0
      %p113 = por %p111, %p112
      %p114 = scmp.ne.s32.totalorder %s102, %s103
      %p115 = scmp.eq.s32.totalorder %s23, 1
      %p116 = por %p114, %p115
      %p118 = scmp.ne.s32.totalorder %s103, %s117
      %p119 = scmp.eq.s32.totalorder %s23, 0
      %p120 = por %p118, %p119
      %s122 = sadd.s32 %s121, 1
      %p125 = scmp.eq.s32.totalorder %s17, 1
      %p126 = scmp.ne.s32.totalorder %s121, %s123
      %p127 = scmp.eq.s32.totalorder %s17, 0
      %p128 = por %p126, %p127
      %p129 = scmp.ne.s32.totalorder %s121, %s123
      %p130 = scmp.eq.s32.totalorder %s22, 1
      %p131 = por %p129, %p130
      %p132 = scmp.ne.s32.totalorder %s123, %s124
      %p133 = scmp.eq.s32.totalorder %s22, 0
      %p134 = por %p132, %p133
      %p135 = scmp.ne.s32.totalorder %s123, %s124
      %p136 = scmp.eq.s32.totalorder %s23, 1
      %p137 = por %p135, %p136
      %p139 = scmp.ne.s32.totalorder %s124, %s138
      %p140 = scmp.eq.s32.totalorder %s23, 0
      %p141 = por %p139, %p140
      %s143 = sadd.s32 %s142, 1
      %p146 = scmp.eq.s32.totalorder %s17, 1
      %p147 = scmp.ne.s32.totalorder %s142, %s144
      %p148 = scmp.eq.s32.totalorder %s17, 0
      %p149 = por %p147, %p148
      %p150 = scmp.ne.s32.totalorder %s142, %s144
      %p151 = scmp.eq.s32.totalorder %s22, 1
      %p152 = por %p150, %p151
      %p153 = scmp.ne.s32.totalorder %s144, %s145
      %p154 = scmp.eq.s32.totalorder %s22, 0
      %p155 = por %p153, %p154
      %p156 = scmp.ne.s32.totalorder %s144, %s145
      %p157 = scmp.eq.s32.totalorder %s23, 1
      %p158 = por %p156, %p157
      %p160 = scmp.ne.s32.totalorder %s145, %s159
      %p161 = scmp.eq.s32.totalorder %s23, 0
      %p162 = por %p160, %p161
      %s164 = sadd.s32 %s163, 1
      %p167 = scmp.eq.s32.totalorder %s17, 1
      %p168 = scmp.ne.s32.totalorder %s163, %s165
      %p169 = scmp.eq.s32.totalorder %s17, 0
      %p170 = por %p168, %p169
      %p171 = scmp.ne.s32.totalorder %s163, %s165
      %p172 = scmp.eq.s32.totalorder %s22, 1
      %p173 = por %p171, %p172
      %p174 = scmp.ne.s32.totalorder %s165, %s166
      %p175 = scmp.eq.s32.totalorder %s22, 0
      %p176 = por %p174, %p175
      %p177 = scmp.ne.s32.totalorder %s165, %s166
      %p178 = scmp.eq.s32.totalorder %s23, 1
      %p179 = por %p177, %p178
      %p181 = scmp.ne.s32.totalorder %s166, %s180
      %p182 = scmp.eq.s32.totalorder %s23, 0
      %p183 = por %p181, %p182
      %s185 = sadd.s32 %s184, 1
      %p188 = scmp.eq.s32.totalorder %s17, 1
      %p189 = scmp.ne.s32.totalorder %s184, %s186
      %p190 = scmp.eq.s32.totalorder %s17, 0
      %p191 = por %p189, %p190
      %p192 = scmp.ne.s32.totalorder %s184, %s186
      %p193 = scmp.eq.s32.totalorder %s22, 1
      %p194 = por %p192, %p193
      %p195 = scmp.ne.s32.totalorder %s186, %s187
      %p196 = scmp.eq.s32.totalorder %s22, 0
      %p197 = por %p195, %p196
      %p198 = scmp.ne.s32.totalorder %s186, %s187
      %p199 = scmp.eq.s32.totalorder %s23, 1
      %p200 = por %p198, %p199
      %p202 = scmp.ne.s32.totalorder %s187, %s201
      %p203 = scmp.eq.s32.totalorder %s23, 0
      %p204 = por %p202, %p203
      %s206 = sadd.s32 %s205, 1
      %p209 = scmp.eq.s32.totalorder %s17, 1
      %p210 = scmp.ne.s32.totalorder %s205, %s207
      %p211 = scmp.eq.s32.totalorder %s17, 0
      %p212 = por %p210, %p211
      %p213 = scmp.ne.s32.totalorder %s205, %s207
      %p214 = scmp.eq.s32.totalorder %s22, 1
      %p215 = por %p213, %p214
      %p216 = scmp.ne.s32.totalorder %s207, %s208
      %p217 = scmp.eq.s32.totalorder %s22, 0
      %p218 = por %p216, %p217
      %p219 = scmp.ne.s32.totalorder %s207, %s208
      %p220 = scmp.eq.s32.totalorder %s23, 1
      %p221 = por %p219, %p220
      %p223 = scmp.ne.s32.totalorder %s208, %s222
      %p224 = scmp.eq.s32.totalorder %s23, 0
      %p225 = por %p223, %p224
      %s226 = ssub.s32 %s24, %s43
      %s227 = ssub.s32 %s25, %s39
      %s228 = sor.u32 %s226, %s227
      %p229 = scmp.eq.s32.totalorder %s228, 0
      %s231 = sadd.s32 %s230, 1
      %s232 = scalar_select %p229, %s230, %s231
      %p235 = pneg %p229
      %p236 = scmp.eq.s32.totalorder %s17, 1
      %p237 = por %p235, %p236
      %p238 = scmp.ne.s32.totalorder %s230, %s233
      %p239 = scmp.eq.s32.totalorder %s17, 0
      %p240 = por %p238, %p239
      %p241 = scmp.ne.s32.totalorder %s230, %s233
      %p242 = scmp.eq.s32.totalorder %s22, 1
      %p243 = por %p241, %p242
      %p244 = scmp.ne.s32.totalorder %s233, %s234
      %p245 = scmp.eq.s32.totalorder %s22, 0
      %p246 = por %p244, %p245
      %p247 = scmp.ne.s32.totalorder %s233, %s234
      %p248 = scmp.eq.s32.totalorder %s23, 1
      %p249 = por %p247, %p248
      %p251 = scmp.ne.s32.totalorder %s234, %s250
      %p252 = scmp.eq.s32.totalorder %s23, 0
      %p253 = por %p251, %p252
      %p254 = scmp.le.s32.totalorder 1, %s17
      %p255 = scmp.lt.s32.totalorder %s17, 3
      %p256 = pnand %p254, %p255
      %p257 = pneg %p256
      // Predicated region
      $region9: #{tpu_custom_call.1} parent=5 // pred_check
        _
      $region10: #{tpu_custom_call.1} parent=5 // pred_check_branch
        %259 = sbr.rel (%p256) target = $region12
      $region11: #{tpu_custom_call.1} parent=5 // pred_region
        %s260 = ssub.s32 %s17, 1
        // Predicated region
        $region13: #{tpu_custom_call.1} parent=11 // pred_check
          %p261 = pneg %p113
        $region14: #{tpu_custom_call.1} parent=11 // pred_check_branch
          %263 = sbr.rel (%p261) target = $region16
        $region15: #{tpu_custom_call.1} parent=11 // pred_region
          _
        $region16: #{tpu_custom_call.1} parent=11 // pred_fallthru
          _
        // Predicated region
        $region17: #{tpu_custom_call.1} parent=11 // pred_check
          %p264 = pneg %p134
        $region18: #{tpu_custom_call.1} parent=11 // pred_check_branch
          %266 = sbr.rel (%p264) target = $region20
        $region19: #{tpu_custom_call.1} parent=11 // pred_region
          _
        $region20: #{tpu_custom_call.1} parent=11 // pred_fallthru
          _
        // Predicated region
        $region21: #{tpu_custom_call.1} parent=11 // pred_check
          %p267 = pneg %p155
        $region22: #{tpu_custom_call.1} parent=11 // pred_check_branch
          %269 = sbr.rel (%p267) target = $region24
        $region23: #{tpu_custom_call.1} parent=11 // pred_region
          _
        $region24: #{tpu_custom_call.1} parent=11 // pred_fallthru
          _
        // Predicated region
        $region25: #{tpu_custom_call.1} parent=11 // pred_check
          %p270 = pneg %p176
        $region26: #{tpu_custom_call.1} parent=11 // pred_check_branch
          %272 = sbr.rel (%p270) target = $region28
        $region27: #{tpu_custom_call.1} parent=11 // pred_region
          _
        $region28: #{tpu_custom_call.1} parent=11 // pred_fallthru
          _
        // Predicated region
        $region29: #{tpu_custom_call.1} parent=11 // pred_check
          %p273 = pneg %p197
        $region30: #{tpu_custom_call.1} parent=11 // pred_check_branch
          %275 = sbr.rel (%p273) target = $region32
        $region31: #{tpu_custom_call.1} parent=11 // pred_region
          _
        $region32: #{tpu_custom_call.1} parent=11 // pred_fallthru
          _
        // Predicated region
        $region33: #{tpu_custom_call.1} parent=11 // pred_check
          %p276 = pneg %p218
        $region34: #{tpu_custom_call.1} parent=11 // pred_check_branch
          %278 = sbr.rel (%p276) target = $region36
        $region35: #{tpu_custom_call.1} parent=11 // pred_region
          _
        $region36: #{tpu_custom_call.1} parent=11 // pred_fallthru
          _
      $region12: #{tpu_custom_call.1} parent=5 // pred_fallthru
        _
      %p279 = scmp.lt.s32.totalorder %s17, 2
      // Predicated region
      $region37: #{tpu_custom_call.1} parent=5 // pred_check
        %p280 = pneg %p279
      $region38: #{tpu_custom_call.1} parent=5 // pred_check_branch
        %282 = sbr.rel (%p280) target = $region40
      $region39: #{tpu_custom_call.1} parent=5 // pred_region
        // Predicated region
        $region41: #{tpu_custom_call.1} parent=39 // pred_check
          %p283 = pneg %p58
        $region42: #{tpu_custom_call.1} parent=39 // pred_check_branch
          %285 = sbr.rel (%p283) target = $region44
        $region43: #{tpu_custom_call.1} parent=39 // pred_region
          %p286 = scmp.lt.s32.totalorder %s24, 1
          %s287 = scalar_select %p286, %s24, 1
          %p288 = scmp.lt.s32.totalorder %s25, 0
          %s289 = scalar_select %p288, %s25, 0
          %s290 = sadd.s32 %s289, %s287
          %s291 = smul.addr %s290, 8
          %s292 = scalar_lea.vmem %s0, %s291
        $region44: #{tpu_custom_call.1} parent=39 // pred_fallthru
          _
        // Predicated region
        $region45: #{tpu_custom_call.1} parent=39 // pred_check
          %p293 = pneg %p86
        $region46: #{tpu_custom_call.1} parent=39 // pred_check_branch
          %295 = sbr.rel (%p293) target = $region48
        $region47: #{tpu_custom_call.1} parent=39 // pred_region
          %p296 = scmp.lt.s32.totalorder %s24, 1
          %s297 = scalar_select %p296, %s24, 1
          %p298 = scmp.lt.s32.totalorder %s26, 0
          %s299 = scalar_select %p298, %s26, 0
          %s300 = sadd.s32 %s299, %s297
          %s301 = smul.addr %s300, 8
          %s302 = scalar_lea.vmem %s1, %s301
        $region48: #{tpu_custom_call.1} parent=39 // pred_fallthru
          _
      $region40: #{tpu_custom_call.1} parent=5 // pred_fallthru
        _
      %p303 = scmp.le.s32.totalorder 1, %s17
      %p304 = scmp.lt.s32.totalorder %s17, 3
      %p305 = pnand %p303, %p304
      %p306 = pneg %p305
      // Predicated region
      $region49: #{tpu_custom_call.1} parent=5 // pred_check
        _
      $region50: #{tpu_custom_call.1} parent=5 // pred_check_branch
        %308 = sbr.rel (%p305) target = $region52
      $region51: #{tpu_custom_call.1} parent=5 // pred_region
        %s309 = ssub.s32 %s17, 1
        %p310 = scmp.lt.s32.totalorder %s27, 1
        %s311 = scalar_select %p310, %s27, 1
        %p312 = scmp.lt.s32.totalorder %s28, 0
        %s313 = scalar_select %p312, %s28, 0
        %s314 = sadd.s32 %s313, %s311
        %s315 = smul.addr %s314, 8
        %s316 = scalar_lea.vmem %s0, %s315
        %p317 = pneg %p64
        %p318 = pneg %p61
        %p319 = scmp.lt.s32.totalorder %s27, 1
        %s320 = scalar_select %p319, %s27, 1
        %p321 = scmp.lt.s32.totalorder %s29, 0
        %s322 = scalar_select %p321, %s29, 0
        %s323 = sadd.s32 %s322, %s320
        %s324 = smul.addr %s323, 8
        %s325 = scalar_lea.vmem %s1, %s324
        %p326 = pneg %p92
        %p327 = pneg %p89
        %p328 = pneg %p113
        %p329 = pneg %p110
        %p330 = pneg %p134
        %p331 = pneg %p131
        %p332 = pneg %p155
        %p333 = pneg %p152
        %p334 = pneg %p176
        %p335 = pneg %p173
        %p336 = pneg %p197
        %p337 = pneg %p194
        %p338 = pneg %p218
        %p339 = pneg %p215
        %p340 = pneg %p246
        %p341 = pneg %p243
        %s342 = sand.u32 %s233, 1
        %s343 = scalar_lea.sflag [#allocation7], %s342
        %s344 = sand.u32 %s233, 1
        %s345 = smul.addr %s344, 8
        %s346 = scalar_lea.vmem [#allocation6], %s345
        %p347 = scmp.lt.s32.totalorder %s27, 1
        %s348 = scalar_select %p347, %s27, 1
        %p349 = scmp.lt.s32.totalorder %s28, 0
        %s350 = scalar_select %p349, %s28, 0
        %s351 = sadd.s32 %s350, %s348
        %s352 = smul.addr %s351, 8
        %s353 = scalar_lea.vmem %s0, %s352
        %p354 = scmp.lt.s32.totalorder %s27, 1
        %s355 = scalar_select %p354, %s27, 1
        %p356 = scmp.lt.s32.totalorder %s29, 0
        %s357 = scalar_select %p356, %s29, 0
        %s358 = sadd.s32 %s357, %s355
        %s359 = smul.addr %s358, 8
        %s360 = scalar_lea.vmem %s1, %s359
        %p361 = scmp.eq.s32.totalorder %s29, 0
        // Predicated region
        $region53: #{tpu_custom_call.1} parent=51 // pred_check
          %p362 = pneg %p361
        $region54: #{tpu_custom_call.1} parent=51 // pred_check_branch
          %364 = sbr.rel (%p362) target = $region56
        $region55: #{tpu_custom_call.1} parent=51 // pred_region
          %v365 = vld [vmem:[%s353] sm:$0xff]
          %v366 = vld [vmem:[%s2] sm:$0xff]
          %v367 = vld [vmem:[%s2 + $0x8] sm:$0xff]
          %v368 = vld [vmem:[%s2 + $0x10] sm:$0xff]
          %v369 = vld [vmem:[%s2 + $0x18] sm:$0xff]
          %v370 = vld [vmem:[%s3] sm:$0xff]
          %v371 = vld [vmem:[%s3 + $0x8] sm:$0xff]
          %v372 = vld [vmem:[%s3 + $0x10] sm:$0xff]
          %v373 = vld [vmem:[%s3 + $0x18] sm:$0xff]
          %375 = vset.pattern.permute.xlu0 0
          %376 = vperm.xlu0 %375, %v370
          %v377 = vpop.permute.xlu0 %376
          %380 = vset.pattern.permute.xlu0 0
          %381 = vperm.xlu0 %380, %v371
          %v382 = vpop.permute.xlu0 %381
          %385 = vset.pattern.permute.xlu0 0
          %386 = vperm.xlu0 %385, %v372
          %v387 = vpop.permute.xlu0 %386
          %390 = vset.pattern.permute.xlu0 0
          %391 = vperm.xlu0 %390, %v373
          %v392 = vpop.permute.xlu0 %391
          %vm394 = vcmask 261120
          %v396 = vsel %vm394, %v366, 0
          %v399 = vsel %vm394, %v367, 0
          %v402 = vsel %vm394, %v368, 0
          %v405 = vsel %vm394, %v369, 0
          %v408 = vsel %vm394, %v365, 0
          %410 = vmatprep.subr.mxu0 0.0
          %411 = vmatpush1.xpose.msra.mxu0 0.0
          %412 = vmatprep.subr.mxu0 0.0
          %413 = vmatpush1.xpose.msra.mxu0 0.0
          %414 = vmatprep.subr.mxu0 0.0
          %415 = vmatpush1.xpose.msra.mxu0 0.0
          %416 = vmatprep.subr.mxu0 0.0
          %417 = vmatpush1.xpose.msra.mxu0 0.0
          %418 = vmatprep.subr.mxu0 0.0
          %419 = vmatpush1.xpose.msra.mxu0 0.0
          %420 = vmatprep.subr.mxu0 0.0
          %421 = vmatpush1.xpose.msra.mxu0 0.0
          %422 = vmatprep.subr.mxu0 0.0
          %423 = vmatpush1.xpose.msra.mxu0 0.0
          %424 = vmatprep.subr.mxu0 0.0
          %425 = vmatpush1.xpose.msra.mxu0 0.0
          %426 = vmatprep.subr.mxu0 0.0
          %427 = vmatpush1.xpose.msra.mxu0 0.0
          %428 = vmatprep.subr.mxu0 0.0
          %429 = vmatpush1.xpose.msra.mxu0 0.0
          %430 = vmatprep.subr.mxu0 0.0
          %431 = vmatpush1.xpose.msra.mxu0 0.0
          %432 = vmatprep.subr.mxu0 0.0
          %433 = vmatpush1.xpose.msra.mxu0 0.0
          %434 = vmatprep.subr.mxu0 0.0
          %435 = vmatpush1.xpose.msra.mxu0 0.0
          %436 = vmatprep.subr.mxu0 0.0
          %437 = vmatpush1.xpose.msra.mxu0 0.0
          %438 = vmatprep.subr.mxu0 0.0
          %439 = vmatpush1.xpose.msra.mxu0 0.0
          %440 = vmatprep.subr.mxu0 0.0
          %441 = vmatpush1.xpose.msra.mxu0 %v408
          %442 = vmatprep.subr.mxu0 0.0
          %443 = vmatpush2.xpose.msra.mxu0 0.0
          %444 = vmatprep.subr.mxu0 0.0
          %445 = vmatpush2.xpose.msra.mxu0 0.0
          %446 = vmatprep.subr.mxu0 0.0
          %447 = vmatpush2.xpose.msra.mxu0 0.0
          %448 = vmatprep.subr.mxu0 0.0
          %449 = vmatpush2.xpose.msra.mxu0 0.0
          %450 = vmatprep.subr.mxu0 0.0
          %451 = vmatpush2.xpose.msra.mxu0 0.0
          %452 = vmatprep.subr.mxu0 0.0
          %453 = vmatpush2.xpose.msra.mxu0 0.0
          %454 = vmatprep.subr.mxu0 0.0
          %455 = vmatpush2.xpose.msra.mxu0 0.0
          %456 = vmatprep.subr.mxu0 0.0
          %457 = vmatpush2.xpose.msra.mxu0 0.0
          %458 = vmatprep.subr.mxu0 0.0
          %459 = vmatpush2.xpose.msra.mxu0 0.0
          %460 = vmatprep.subr.mxu0 0.0
          %461 = vmatpush2.xpose.msra.mxu0 0.0
          %462 = vmatprep.subr.mxu0 0.0
          %463 = vmatpush2.xpose.msra.mxu0 0.0
          %464 = vmatprep.subr.mxu0 0.0
          %465 = vmatpush2.xpose.msra.mxu0 0.0
          %466 = vmatprep.subr.mxu0 0.0
          %467 = vmatpush2.xpose.msra.mxu0 0.0
          %468 = vmatprep.subr.mxu0 0.0
          %469 = vmatpush2.xpose.msra.mxu0 0.0
          %470 = vmatprep.subr.mxu0 0.0
          %471 = vmatpush2.xpose.msra.mxu0 0.0
          %472 = vmatprep.subr.mxu0 0.0
          %473 = vmatpush2.xpose.msra.mxu0 0.0
          %474 = vmatprep.mubr.f32.mxu0 0.0
          %475 = vmatmul.mubr.f32.gmra.mxu0 %v396
          %v476 = vpop.f32.mrf.mxu0
          %v477 = vadd.f32 %v377, %v476
          %v478 = vpop.f32.mrf.mxu0
          %479 = vmatprep.mubr.f32.mxu0 0.0
          %480 = vmatmul.mubr.f32.gmra.mxu0 %v399
          %v481 = vpop.f32.mrf.mxu0
          %v482 = vadd.f32 %v382, %v481
          %v483 = vpop.f32.mrf.mxu0
          %484 = vmatprep.mubr.f32.mxu0 0.0
          %485 = vmatmul.mubr.f32.gmra.mxu0 %v402
          %v486 = vpop.f32.mrf.mxu0
          %v487 = vadd.f32 %v387, %v486
          %v488 = vpop.f32.mrf.mxu0
          %489 = vmatprep.mubr.f32.mxu0 0.0
          %490 = vmatmul.mubr.f32.gmra.mxu0 %v405
          %v491 = vpop.f32.mrf.mxu0
          %v492 = vadd.f32 %v392, %v491
          %v493 = vpop.f32.mrf.mxu0
          %494 = vdwg.mxu0
          %vm495 = vcmask 64512
          %496 = vst.msk [vmem:[#allocation2] sm:$0xff] %vm495, %v477
          %497 = vst.msk [vmem:[#allocation2 + $0x8] sm:$0xff] %vm495, %v482
          %498 = vst.msk [vmem:[#allocation2 + $0x10] sm:$0xff] %vm495, %v487
          %499 = vst.msk [vmem:[#allocation2 + $0x18] sm:$0xff] %vm495, %v492
          %vm500 = vcmask 57344
          %501 = vst.msk [vmem:[#allocation3] sm:$0x1] %vm500, -inf
          %502 = vst.msk [vmem:[#allocation3 + $0x1] sm:$0x1] %vm500, -inf
          %503 = vst.msk [vmem:[#allocation4] sm:$0x1] %vm500, 0.0
          %504 = vst.msk [vmem:[#allocation4 + $0x1] sm:$0x1] %vm500, 0.0
          %505 = vst.msk [vmem:[#allocation5] sm:$0xff] %vm495, 0.0
          %506 = vst.msk [vmem:[#allocation5 + $0x8] sm:$0xff] %vm495, 0.0
          %507 = vst.msk [vmem:[#allocation5 + $0x10] sm:$0xff] %vm495, 0.0
          %508 = vst.msk [vmem:[#allocation5 + $0x18] sm:$0xff] %vm495, 0.0
        $region56: #{tpu_custom_call.1} parent=51 // pred_fallthru
          _
        %v509 = vld [vmem:[%s360] sm:$0xff]
        %v510 = vld [vmem:[%s4] sm:$0xff]
        %v511 = vld [vmem:[%s4 + $0x8] sm:$0xff]
        %v512 = vld [vmem:[%s4 + $0x10] sm:$0xff]
        %v513 = vld [vmem:[%s4 + $0x18] sm:$0xff]
        %v514 = vld [vmem:[%s4 + $0x20] sm:$0xff]
        %v515 = vld [vmem:[%s4 + $0x28] sm:$0xff]
        %v516 = vld [vmem:[%s4 + $0x30] sm:$0xff]
        %v517 = vld [vmem:[%s4 + $0x38] sm:$0xff]
        %v518 = vld [vmem:[%s5] sm:$0xff]
        %v519 = vld [vmem:[%s5 + $0x8] sm:$0xff]
        %v520 = vld [vmem:[%s5 + $0x10] sm:$0xff]
        %v521 = vld [vmem:[%s5 + $0x18] sm:$0xff]
        %v522 = vld [vmem:[%s5 + $0x20] sm:$0xff]
        %v523 = vld [vmem:[%s5 + $0x28] sm:$0xff]
        %v524 = vld [vmem:[%s5 + $0x30] sm:$0xff]
        %v525 = vld [vmem:[%s5 + $0x38] sm:$0xff]
        %527 = vset.pattern.permute.xlu0 0
        %528 = vperm.xlu0 %527, %v518
        %v529 = vpop.permute.xlu0 %528
        %532 = vset.pattern.permute.xlu0 0
        %533 = vperm.xlu0 %532, %v519
        %v534 = vpop.permute.xlu0 %533
        %537 = vset.pattern.permute.xlu0 0
        %538 = vperm.xlu0 %537, %v520
        %v539 = vpop.permute.xlu0 %538
        %542 = vset.pattern.permute.xlu0 0
        %543 = vperm.xlu0 %542, %v521
        %v544 = vpop.permute.xlu0 %543
        %547 = vset.pattern.permute.xlu0 0
        %548 = vperm.xlu0 %547, %v522
        %v549 = vpop.permute.xlu0 %548
        %552 = vset.pattern.permute.xlu0 0
        %553 = vperm.xlu0 %552, %v523
        %v554 = vpop.permute.xlu0 %553
        %557 = vset.pattern.permute.xlu0 0
        %558 = vperm.xlu0 %557, %v524
        %v559 = vpop.permute.xlu0 %558
        %562 = vset.pattern.permute.xlu0 0
        %563 = vperm.xlu0 %562, %v525
        %v564 = vpop.permute.xlu0 %563
        %vm566 = vcmask 261120
        %v568 = vsel %vm566, %v510, 0
        %v571 = vsel %vm566, %v511, 0
        %v574 = vsel %vm566, %v512, 0
        %v577 = vsel %vm566, %v513, 0
        %v580 = vsel %vm566, %v514, 0
        %v583 = vsel %vm566, %v515, 0
        %v586 = vsel %vm566, %v516, 0
        %v589 = vsel %vm566, %v517, 0
        %v592 = vsel %vm566, %v509, 0
        %594 = vmatprep.subr.mxu0 0.0
        %595 = vmatpush1.xpose.msra.mxu0 0.0
        %596 = vmatprep.subr.mxu0 0.0
        %597 = vmatpush1.xpose.msra.mxu0 0.0
        %598 = vmatprep.subr.mxu0 0.0
        %599 = vmatpush1.xpose.msra.mxu0 0.0
        %600 = vmatprep.subr.mxu0 0.0
        %601 = vmatpush1.xpose.msra.mxu0 0.0
        %602 = vmatprep.subr.mxu0 0.0
        %603 = vmatpush1.xpose.msra.mxu0 0.0
        %604 = vmatprep.subr.mxu0 0.0
        %605 = vmatpush1.xpose.msra.mxu0 0.0
        %606 = vmatprep.subr.mxu0 0.0
        %607 = vmatpush1.xpose.msra.mxu0 0.0
        %608 = vmatprep.subr.mxu0 0.0
        %609 = vmatpush1.xpose.msra.mxu0 0.0
        %610 = vmatprep.subr.mxu0 0.0
        %611 = vmatpush1.xpose.msra.mxu0 0.0
        %612 = vmatprep.subr.mxu0 0.0
        %613 = vmatpush1.xpose.msra.mxu0 0.0
        %614 = vmatprep.subr.mxu0 0.0
        %615 = vmatpush1.xpose.msra.mxu0 0.0
        %616 = vmatprep.subr.mxu0 0.0
        %617 = vmatpush1.xpose.msra.mxu0 0.0
        %618 = vmatprep.subr.mxu0 0.0
        %619 = vmatpush1.xpose.msra.mxu0 0.0
        %620 = vmatprep.subr.mxu0 0.0
        %621 = vmatpush1.xpose.msra.mxu0 0.0
        %622 = vmatprep.subr.mxu0 0.0
        %623 = vmatpush1.xpose.msra.mxu0 0.0
        %624 = vmatprep.subr.mxu0 0.0
        %625 = vmatpush1.xpose.msra.mxu0 %v592
        %626 = vmatprep.subr.mxu0 0.0
        %627 = vmatpush2.xpose.msra.mxu0 0.0
        %628 = vmatprep.subr.mxu0 0.0
        %629 = vmatpush2.xpose.msra.mxu0 0.0
        %630 = vmatprep.subr.mxu0 0.0
        %631 = vmatpush2.xpose.msra.mxu0 0.0
        %632 = vmatprep.subr.mxu0 0.0
        %633 = vmatpush2.xpose.msra.mxu0 0.0
        %634 = vmatprep.subr.mxu0 0.0
        %635 = vmatpush2.xpose.msra.mxu0 0.0
        %636 = vmatprep.subr.mxu0 0.0
        %637 = vmatpush2.xpose.msra.mxu0 0.0
        %638 = vmatprep.subr.mxu0 0.0
        %639 = vmatpush2.xpose.msra.mxu0 0.0
        %640 = vmatprep.subr.mxu0 0.0
        %641 = vmatpush2.xpose.msra.mxu0 0.0
        %642 = vmatprep.subr.mxu0 0.0
        %643 = vmatpush2.xpose.msra.mxu0 0.0
        %644 = vmatprep.subr.mxu0 0.0
        %645 = vmatpush2.xpose.msra.mxu0 0.0
        %646 = vmatprep.subr.mxu0 0.0
        %647 = vmatpush2.xpose.msra.mxu0 0.0
        %648 = vmatprep.subr.mxu0 0.0
        %649 = vmatpush2.xpose.msra.mxu0 0.0
        %650 = vmatprep.subr.mxu0 0.0
        %651 = vmatpush2.xpose.msra.mxu0 0.0
        %652 = vmatprep.subr.mxu0 0.0
        %653 = vmatpush2.xpose.msra.mxu0 0.0
        %654 = vmatprep.subr.mxu0 0.0
        %655 = vmatpush2.xpose.msra.mxu0 0.0
        %656 = vmatprep.subr.mxu0 0.0
        %657 = vmatpush2.xpose.msra.mxu0 0.0
        %658 = vmatprep.mubr.f32.mxu0 0.0
        %659 = vmatmul.mubr.f32.gmra.mxu0 %v568
        %v660 = vpop.f32.mrf.mxu0
        %v661 = vadd.f32 %v529, %v660
        %v662 = vpop.f32.mrf.mxu0
        %663 = vmatprep.mubr.f32.mxu0 0.0
        %664 = vmatmul.mubr.f32.gmra.mxu0 %v571
        %v665 = vpop.f32.mrf.mxu0
        %v666 = vadd.f32 %v534, %v665
        %v667 = vpop.f32.mrf.mxu0
        %668 = vmatprep.mubr.f32.mxu0 0.0
        %669 = vmatmul.mubr.f32.gmra.mxu0 %v574
        %v670 = vpop.f32.mrf.mxu0
        %v671 = vadd.f32 %v539, %v670
        %v672 = vpop.f32.mrf.mxu0
        %673 = vmatprep.mubr.f32.mxu0 0.0
        %674 = vmatmul.mubr.f32.gmra.mxu0 %v577
        %v675 = vpop.f32.mrf.mxu0
        %v676 = vadd.f32 %v544, %v675
        %v677 = vpop.f32.mrf.mxu0
        %678 = vmatprep.mubr.f32.mxu0 0.0
        %679 = vmatmul.mubr.f32.gmra.mxu0 %v580
        %v680 = vpop.f32.mrf.mxu0
        %v681 = vadd.f32 %v549, %v680
        %v682 = vpop.f32.mrf.mxu0
        %683 = vmatprep.mubr.f32.mxu0 0.0
        %684 = vmatmul.mubr.f32.gmra.mxu0 %v583
        %v685 = vpop.f32.mrf.mxu0
        %v686 = vadd.f32 %v554, %v685
        %v687 = vpop.f32.mrf.mxu0
        %688 = vmatprep.mubr.f32.mxu0 0.0
        %689 = vmatmul.mubr.f32.gmra.mxu0 %v586
        %v690 = vpop.f32.mrf.mxu0
        %v691 = vadd.f32 %v559, %v690
        %v692 = vpop.f32.mrf.mxu0
        %693 = vmatprep.mubr.f32.mxu0 0.0
        %694 = vmatmul.mubr.f32.gmra.mxu0 %v589
        %v695 = vpop.f32.mrf.mxu0
        %v696 = vadd.f32 %v564, %v695
        %v697 = vpop.f32.mrf.mxu0
        %698 = vdwg.mxu0
        %v699 = vld [vmem:[#allocation2] sm:$0xff]
        %v700 = vld [vmem:[#allocation2 + $0x8] sm:$0xff]
        %v701 = vld [vmem:[#allocation2 + $0x10] sm:$0xff]
        %v702 = vld [vmem:[#allocation2 + $0x18] sm:$0xff]
        %703 = vxpose.xlu0.b32.start [1/16] %v661, 128
        %704 = vxpose.xlu0.b32.cont [2/16] %v666, 128
        %705 = vxpose.xlu0.b32.cont [3/16] 0.0, 128
        %706 = vxpose.xlu0.b32.cont [4/16] 0.0, 128
        %707 = vxpose.xlu0.b32.cont [5/16] 0.0, 128
        %708 = vxpose.xlu0.b32.cont [6/16] 0.0, 128
        %709 = vxpose.xlu0.b32.cont [7/16] 0.0, 128
        %710 = vxpose.xlu0.b32.cont [8/16] 0.0, 128
        %711 = vxpose.xlu0.b32.cont [9/16] 0.0, 128
        %712 = vxpose.xlu0.b32.cont [10/16] 0.0, 128
        %713 = vxpose.xlu0.b32.cont [11/16] 0.0, 128
        %714 = vxpose.xlu0.b32.cont [12/16] 0.0, 128
        %715 = vxpose.xlu0.b32.cont [13/16] 0.0, 128
        %716 = vxpose.xlu0.b32.cont [14/16] 0.0, 128
        %717 = vxpose.xlu0.b32.cont [15/16] 0.0, 128
        %718 = vxpose.xlu0.b32.end [16/16] 0.0, 128
        %v719 = vpop.trf.xlu0
        %v720 = vpop.trf.xlu0
        %v721 = vpop.trf.xlu0
        %v722 = vpop.trf.xlu0
        %v723 = vpop.trf.xlu0
        %v724 = vpop.trf.xlu0
        %v725 = vpop.trf.xlu0
        %v726 = vpop.trf.xlu0
        %v727 = vpop.trf.xlu0
        %v728 = vpop.trf.xlu0
        %v729 = vpop.trf.xlu0
        %v730 = vpop.trf.xlu0
        %v731 = vpop.trf.xlu0
        %v732 = vpop.trf.xlu0
        %v733 = vpop.trf.xlu0
        %v734 = vpop.trf.xlu0
        %vm735 = vcmask 130048
        %v737 = vsel %vm735, %v719, 0
        %739 = vmatprep.subr.mxu0 0.0
        %740 = vmatpush1.msra.mxu0 0.0
        %741 = vmatprep.subr.mxu0 0.0
        %742 = vmatpush1.msra.mxu0 0.0
        %743 = vmatprep.subr.mxu0 0.0
        %744 = vmatpush1.msra.mxu0 0.0
        %745 = vmatprep.subr.mxu0 0.0
        %746 = vmatpush1.msra.mxu0 0.0
        %747 = vmatprep.subr.mxu0 0.0
        %748 = vmatpush1.msra.mxu0 0.0
        %749 = vmatprep.subr.mxu0 0.0
        %750 = vmatpush1.msra.mxu0 0.0
        %751 = vmatprep.subr.mxu0 0.0
        %752 = vmatpush1.msra.mxu0 0.0
        %753 = vmatprep.subr.mxu0 0.0
        %754 = vmatpush1.msra.mxu0 0.0
        %755 = vmatprep.subr.mxu0 0.0
        %756 = vmatpush1.msra.mxu0 0.0
        %757 = vmatprep.subr.mxu0 0.0
        %758 = vmatpush1.msra.mxu0 0.0
        %759 = vmatprep.subr.mxu0 0.0
        %760 = vmatpush1.msra.mxu0 0.0
        %761 = vmatprep.subr.mxu0 0.0
        %762 = vmatpush1.msra.mxu0 0.0
        %763 = vmatprep.subr.mxu0 0.0
        %764 = vmatpush1.msra.mxu0 0.0
        %765 = vmatprep.subr.mxu0 0.0
        %766 = vmatpush1.msra.mxu0 0.0
        %767 = vmatprep.subr.mxu0 0.0
        %768 = vmatpush1.msra.mxu0 %v700
        %769 = vmatprep.subr.mxu0 0.0
        %770 = vmatpush1.msra.mxu0 %v699
        %771 = vmatprep.subr.mxu0 0.0
        %772 = vmatpush2.msra.mxu0 0.0
        %773 = vmatprep.subr.mxu0 0.0
        %774 = vmatpush2.msra.mxu0 0.0
        %775 = vmatprep.subr.mxu0 0.0
        %776 = vmatpush2.msra.mxu0 0.0
        %777 = vmatprep.subr.mxu0 0.0
        %778 = vmatpush2.msra.mxu0 0.0
        %779 = vmatprep.subr.mxu0 0.0
        %780 = vmatpush2.msra.mxu0 0.0
        %781 = vmatprep.subr.mxu0 0.0
        %782 = vmatpush2.msra.mxu0 0.0
        %783 = vmatprep.subr.mxu0 0.0
        %784 = vmatpush2.msra.mxu0 0.0
        %785 = vmatprep.subr.mxu0 0.0
        %786 = vmatpush2.msra.mxu0 0.0
        %787 = vmatprep.subr.mxu0 0.0
        %788 = vmatpush2.msra.mxu0 0.0
        %789 = vmatprep.subr.mxu0 0.0
        %790 = vmatpush2.msra.mxu0 0.0
        %791 = vmatprep.subr.mxu0 0.0
        %792 = vmatpush2.msra.mxu0 0.0
        %793 = vmatprep.subr.mxu0 0.0
        %794 = vmatpush2.msra.mxu0 0.0
        %795 = vmatprep.subr.mxu0 0.0
        %796 = vmatpush2.msra.mxu0 0.0
        %797 = vmatprep.subr.mxu0 0.0
        %798 = vmatpush2.msra.mxu0 0.0
        %799 = vmatprep.subr.mxu0 0.0
        %800 = vmatpush2.msra.mxu0 0.0
        %801 = vmatprep.subr.mxu0 0.0
        %802 = vmatpush2.msra.mxu0 0.0
        %803 = vmatprep.mubr.f32.mxu0 0.0
        %804 = vmatmul.mubr.f32.gmra.mxu0 %v737
        %v805 = vpop.f32.mrf.mxu0
        %v806 = vadd.f32 0.0, %v805
        %v807 = vpop.f32.mrf.mxu0
        %808 = vdwg.mxu0
        %v809 = vld [vmem:[#allocation3] sm:$0x1]
        %v810 = vld [vmem:[#allocation4] sm:$0x1]
        %vm811 = vcmask 64512
        %v812 = vsel %vm811, %v806, -inf
        %v813 = vrot.slane %v812, 4
        %v814 = vmax.f32 %v812, %v813
        %v815 = vrot.slane %v814, 2
        %v816 = vmax.f32 %v814, %v815
        %v817 = vrot.slane %v816, 1
        %v818 = vmax.f32 %v816, %v817
        %v819 = vmax.f32 %v809, %v818
        %v820 = vsub.f32 %v809, %v819
        %v821 = vmul.f32 %v820, 1.442695
        %v822 = vpow.pop %v821
        %v824 = vlaneseq
        %v825 = vshrl.u32 %v824, 7
        %v826 = vsub.s32 0, %v825
        %v827 = vrot.slane %v819, %v826
        %v829 = vsub.f32 %v806, %v827
        %v830 = vmul.f32 %v829, 1.442695
        %v831 = vpow.pop %v830
        %v832 = vmul.f32 %v822, %v810
        %v833 = vsel %vm811, %v831, 0.0
        %v834 = vrot.slane %v833, 4
        %v835 = vadd.f32 %v833, %v834
        %v836 = vrot.slane %v835, 2
        %v837 = vadd.f32 %v835, %v836
        %v838 = vrot.slane %v837, 1
        %v839 = vadd.f32 %v837, %v838
        %v840 = vadd.f32 %v832, %v839
        %vm841 = vcmask 57344
        %842 = vst.msk [vmem:[#allocation4] sm:$0x1] %vm841, %v840
        %v843 = vld [vmem:[#allocation5] sm:$0xff]
        %v844 = vld [vmem:[#allocation5 + $0x8] sm:$0xff]
        %v846 = vlaneseq
        %v847 = vshrl.u32 %v846, 7
        %v848 = vsub.s32 0, %v847
        %v849 = vrot.slane %v822, %v848
        %v851 = vmul.f32 %v849, %v843
        %v852 = vmul.f32 %v849, %v844
        %v854 = vsel %vm811, %v681, 0
        %v857 = vsel %vm811, %v686, 0
        %859 = vmatprep.subr.mxu0 0.0
        %860 = vmatpush1.msra.mxu0 0.0
        %861 = vmatprep.subr.mxu0 0.0
        %862 = vmatpush1.msra.mxu0 0.0
        %863 = vmatprep.subr.mxu0 0.0
        %864 = vmatpush1.msra.mxu0 0.0
        %865 = vmatprep.subr.mxu0 0.0
        %866 = vmatpush1.msra.mxu0 0.0
        %867 = vmatprep.subr.mxu0 0.0
        %868 = vmatpush1.msra.mxu0 0.0
        %869 = vmatprep.subr.mxu0 0.0
        %870 = vmatpush1.msra.mxu0 0.0
        %871 = vmatprep.subr.mxu0 0.0
        %872 = vmatpush1.msra.mxu0 0.0
        %873 = vmatprep.subr.mxu0 0.0
        %874 = vmatpush1.msra.mxu0 0.0
        %875 = vmatprep.subr.mxu0 0.0
        %876 = vmatpush1.msra.mxu0 0.0
        %877 = vmatprep.subr.mxu0 0.0
        %878 = vmatpush1.msra.mxu0 0.0
        %879 = vmatprep.subr.mxu0 0.0
        %880 = vmatpush1.msra.mxu0 0.0
        %881 = vmatprep.subr.mxu0 0.0
        %882 = vmatpush1.msra.mxu0 0.0
        %883 = vmatprep.subr.mxu0 0.0
        %884 = vmatpush1.msra.mxu0 0.0
        %885 = vmatprep.subr.mxu0 0.0
        %886 = vmatpush1.msra.mxu0 0.0
        %887 = vmatprep.subr.mxu0 0.0
        %888 = vmatpush1.msra.mxu0 0.0
        %889 = vmatprep.subr.mxu0 0.0
        %890 = vmatpush1.msra.mxu0 %v831
        %891 = vmatprep.subr.mxu0 0.0
        %892 = vmatpush2.msra.mxu0 0.0
        %893 = vmatprep.subr.mxu0 0.0
        %894 = vmatpush2.msra.mxu0 0.0
        %895 = vmatprep.subr.mxu0 0.0
        %896 = vmatpush2.msra.mxu0 0.0
        %897 = vmatprep.subr.mxu0 0.0
        %898 = vmatpush2.msra.mxu0 0.0
        %899 = vmatprep.subr.mxu0 0.0
        %900 = vmatpush2.msra.mxu0 0.0
        %901 = vmatprep.subr.mxu0 0.0
        %902 = vmatpush2.msra.mxu0 0.0
        %903 = vmatprep.subr.mxu0 0.0
        %904 = vmatpush2.msra.mxu0 0.0
        %905 = vmatprep.subr.mxu0 0.0
        %906 = vmatpush2.msra.mxu0 0.0
        %907 = vmatprep.subr.mxu0 0.0
        %908 = vmatpush2.msra.mxu0 0.0
        %909 = vmatprep.subr.mxu0 0.0
        %910 = vmatpush2.msra.mxu0 0.0
        %911 = vmatprep.subr.mxu0 0.0
        %912 = vmatpush2.msra.mxu0 0.0
        %913 = vmatprep.subr.mxu0 0.0
        %914 = vmatpush2.msra.mxu0 0.0
        %915 = vmatprep.subr.mxu0 0.0
        %916 = vmatpush2.msra.mxu0 0.0
        %917 = vmatprep.subr.mxu0 0.0
        %918 = vmatpush2.msra.mxu0 0.0
        %919 = vmatprep.subr.mxu0 0.0
        %920 = vmatpush2.msra.mxu0 0.0
        %921 = vmatprep.subr.mxu0 0.0
        %922 = vmatpush2.msra.mxu0 0.0
        %923 = vmatprep.mubr.f32.mxu0 0.0
        %924 = vmatmul.mubr.f32.gmra.mxu0 %v854
        %v925 = vpop.f32.mrf.mxu0
        %v926 = vadd.f32 0.0, %v925
        %v927 = vpop.f32.mrf.mxu0
        %928 = vmatprep.mubr.f32.mxu0 0.0
        %929 = vmatmul.mubr.f32.gmra.mxu0 %v857
        %v930 = vpop.f32.mrf.mxu0
        %v931 = vadd.f32 0.0, %v930
        %v932 = vpop.f32.mrf.mxu0
        %933 = vdwg.mxu0
        %v934 = vadd.f32 %v851, %v926
        %v935 = vadd.f32 %v852, %v931
        %936 = vst.msk [vmem:[#allocation5] sm:$0xff] %vm811, %v934
        %937 = vst.msk [vmem:[#allocation5 + $0x8] sm:$0xff] %vm811, %v935
        %938 = vst.msk [vmem:[#allocation3] sm:$0x1] %vm841, %v819
        %939 = vxpose.xlu0.b32.start [1/16] %v671, 128
        %940 = vxpose.xlu0.b32.cont [2/16] %v676, 128
        %941 = vxpose.xlu0.b32.cont [3/16] 0.0, 128
        %942 = vxpose.xlu0.b32.cont [4/16] 0.0, 128
        %943 = vxpose.xlu0.b32.cont [5/16] 0.0, 128
        %944 = vxpose.xlu0.b32.cont [6/16] 0.0, 128
        %945 = vxpose.xlu0.b32.cont [7/16] 0.0, 128
        %946 = vxpose.xlu0.b32.cont [8/16] 0.0, 128
        %947 = vxpose.xlu0.b32.cont [9/16] 0.0, 128
        %948 = vxpose.xlu0.b32.cont [10/16] 0.0, 128
        %949 = vxpose.xlu0.b32.cont [11/16] 0.0, 128
        %950 = vxpose.xlu0.b32.cont [12/16] 0.0, 128
        %951 = vxpose.xlu0.b32.cont [13/16] 0.0, 128
        %952 = vxpose.xlu0.b32.cont [14/16] 0.0, 128
        %953 = vxpose.xlu0.b32.cont [15/16] 0.0, 128
        %954 = vxpose.xlu0.b32.end [16/16] 0.0, 128
        %v955 = vpop.trf.xlu0
        %v956 = vpop.trf.xlu0
        %v957 = vpop.trf.xlu0
        %v958 = vpop.trf.xlu0
        %v959 = vpop.trf.xlu0
        %v960 = vpop.trf.xlu0
        %v961 = vpop.trf.xlu0
        %v962 = vpop.trf.xlu0
        %v963 = vpop.trf.xlu0
        %v964 = vpop.trf.xlu0
        %v965 = vpop.trf.xlu0
        %v966 = vpop.trf.xlu0
        %v967 = vpop.trf.xlu0
        %v968 = vpop.trf.xlu0
        %v969 = vpop.trf.xlu0
        %v970 = vpop.trf.xlu0
        %v972 = vsel %vm735, %v955, 0
        %974 = vmatprep.subr.mxu0 0.0
        %975 = vmatpush1.msra.mxu0 0.0
        %976 = vmatprep.subr.mxu0 0.0
        %977 = vmatpush1.msra.mxu0 0.0
        %978 = vmatprep.subr.mxu0 0.0
        %979 = vmatpush1.msra.mxu0 0.0
        %980 = vmatprep.subr.mxu0 0.0
        %981 = vmatpush1.msra.mxu0 0.0
        %982 = vmatprep.subr.mxu0 0.0
        %983 = vmatpush1.msra.mxu0 0.0
        %984 = vmatprep.subr.mxu0 0.0
        %985 = vmatpush1.msra.mxu0 0.0
        %986 = vmatprep.subr.mxu0 0.0
        %987 = vmatpush1.msra.mxu0 0.0
        %988 = vmatprep.subr.mxu0 0.0
        %989 = vmatpush1.msra.mxu0 0.0
        %990 = vmatprep.subr.mxu0 0.0
        %991 = vmatpush1.msra.mxu0 0.0
        %992 = vmatprep.subr.mxu0 0.0
        %993 = vmatpush1.msra.mxu0 0.0
        %994 = vmatprep.subr.mxu0 0.0
        %995 = vmatpush1.msra.mxu0 0.0
        %996 = vmatprep.subr.mxu0 0.0
        %997 = vmatpush1.msra.mxu0 0.0
        %998 = vmatprep.subr.mxu0 0.0
        %999 = vmatpush1.msra.mxu0 0.0
        %1000 = vmatprep.subr.mxu0 0.0
        %1001 = vmatpush1.msra.mxu0 0.0
        %1002 = vmatprep.subr.mxu0 0.0
        %1003 = vmatpush1.msra.mxu0 %v702
        %1004 = vmatprep.subr.mxu0 0.0
        %1005 = vmatpush1.msra.mxu0 %v701
        %1006 = vmatprep.subr.mxu0 0.0
        %1007 = vmatpush2.msra.mxu0 0.0
        %1008 = vmatprep.subr.mxu0 0.0
        %1009 = vmatpush2.msra.mxu0 0.0
        %1010 = vmatprep.subr.mxu0 0.0
        %1011 = vmatpush2.msra.mxu0 0.0
        %1012 = vmatprep.subr.mxu0 0.0
        %1013 = vmatpush2.msra.mxu0 0.0
        %1014 = vmatprep.subr.mxu0 0.0
        %1015 = vmatpush2.msra.mxu0 0.0
        %1016 = vmatprep.subr.mxu0 0.0
        %1017 = vmatpush2.msra.mxu0 0.0
        %1018 = vmatprep.subr.mxu0 0.0
        %1019 = vmatpush2.msra.mxu0 0.0
        %1020 = vmatprep.subr.mxu0 0.0
        %1021 = vmatpush2.msra.mxu0 0.0
        %1022 = vmatprep.subr.mxu0 0.0
        %1023 = vmatpush2.msra.mxu0 0.0
        %1024 = vmatprep.subr.mxu0 0.0
        %1025 = vmatpush2.msra.mxu0 0.0
        %1026 = vmatprep.subr.mxu0 0.0
        %1027 = vmatpush2.msra.mxu0 0.0
        %1028 = vmatprep.subr.mxu0 0.0
        %1029 = vmatpush2.msra.mxu0 0.0
        %1030 = vmatprep.subr.mxu0 0.0
        %1031 = vmatpush2.msra.mxu0 0.0
        %1032 = vmatprep.subr.mxu0 0.0
        %1033 = vmatpush2.msra.mxu0 0.0
        %1034 = vmatprep.subr.mxu0 0.0
        %1035 = vmatpush2.msra.mxu0 0.0
        %1036 = vmatprep.subr.mxu0 0.0
        %1037 = vmatpush2.msra.mxu0 0.0
        %1038 = vmatprep.mubr.f32.mxu0 0.0
        %1039 = vmatmul.mubr.f32.gmra.mxu0 %v972
        %v1040 = vpop.f32.mrf.mxu0
        %v1041 = vadd.f32 0.0, %v1040
        %v1042 = vpop.f32.mrf.mxu0
        %1043 = vdwg.mxu0
        %s1044 = scalar_lea.vmem [#allocation3], 1
        %v1045 = vld [vmem:[%s1044] sm:$0x1]
        %s1046 = scalar_lea.vmem [#allocation4], 1
        %v1047 = vld [vmem:[%s1046] sm:$0x1]
        %v1048 = vsel %vm811, %v1041, -inf
        %v1049 = vrot.slane %v1048, 4
        %v1050 = vmax.f32 %v1048, %v1049
        %v1051 = vrot.slane %v1050, 2
        %v1052 = vmax.f32 %v1050, %v1051
        %v1053 = vrot.slane %v1052, 1
        %v1054 = vmax.f32 %v1052, %v1053
        %v1055 = vmax.f32 %v1045, %v1054
        %v1056 = vsub.f32 %v1045, %v1055
        %v1057 = vmul.f32 %v1056, 1.442695
        %v1058 = vpow.pop %v1057
        %v1060 = vlaneseq
        %v1061 = vshrl.u32 %v1060, 7
        %v1062 = vsub.s32 0, %v1061
        %v1063 = vrot.slane %v1055, %v1062
        %v1065 = vsub.f32 %v1041, %v1063
        %v1066 = vmul.f32 %v1065, 1.442695
        %v1067 = vpow.pop %v1066
        %v1068 = vmul.f32 %v1058, %v1047
        %v1069 = vsel %vm811, %v1067, 0.0
        %v1070 = vrot.slane %v1069, 4
        %v1071 = vadd.f32 %v1069, %v1070
        %v1072 = vrot.slane %v1071, 2
        %v1073 = vadd.f32 %v1071, %v1072
        %v1074 = vrot.slane %v1073, 1
        %v1075 = vadd.f32 %v1073, %v1074
        %v1076 = vadd.f32 %v1068, %v1075
        %1077 = vst.msk [vmem:[%s1046] sm:$0x1] %vm841, %v1076
        %s1078 = scalar_lea.vmem [#allocation5], 16
        %v1079 = vld [vmem:[%s1078] sm:$0xff]
        %v1080 = vld [vmem:[%s1078 + $0x8] sm:$0xff]
        %v1082 = vlaneseq
        %v1083 = vshrl.u32 %v1082, 7
        %v1084 = vsub.s32 0, %v1083
        %v1085 = vrot.slane %v1058, %v1084
        %v1087 = vmul.f32 %v1085, %v1079
        %v1088 = vmul.f32 %v1085, %v1080
        %v1090 = vsel %vm811, %v691, 0
        %v1093 = vsel %vm811, %v696, 0
        %1095 = vmatprep.subr.mxu0 0.0
        %1096 = vmatpush1.msra.mxu0 0.0
        %1097 = vmatprep.subr.mxu0 0.0
        %1098 = vmatpush1.msra.mxu0 0.0
        %1099 = vmatprep.subr.mxu0 0.0
        %1100 = vmatpush1.msra.mxu0 0.0
        %1101 = vmatprep.subr.mxu0 0.0
        %1102 = vmatpush1.msra.mxu0 0.0
        %1103 = vmatprep.subr.mxu0 0.0
        %1104 = vmatpush1.msra.mxu0 0.0
        %1105 = vmatprep.subr.mxu0 0.0
        %1106 = vmatpush1.msra.mxu0 0.0
        %1107 = vmatprep.subr.mxu0 0.0
        %1108 = vmatpush1.msra.mxu0 0.0
        %1109 = vmatprep.subr.mxu0 0.0
        %1110 = vmatpush1.msra.mxu0 0.0
        %1111 = vmatprep.subr.mxu0 0.0
        %1112 = vmatpush1.msra.mxu0 0.0
        %1113 = vmatprep.subr.mxu0 0.0
        %1114 = vmatpush1.msra.mxu0 0.0
        %1115 = vmatprep.subr.mxu0 0.0
        %1116 = vmatpush1.msra.mxu0 0.0
        %1117 = vmatprep.subr.mxu0 0.0
        %1118 = vmatpush1.msra.mxu0 0.0
        %1119 = vmatprep.subr.mxu0 0.0
        %1120 = vmatpush1.msra.mxu0 0.0
        %1121 = vmatprep.subr.mxu0 0.0
        %1122 = vmatpush1.msra.mxu0 0.0
        %1123 = vmatprep.subr.mxu0 0.0
        %1124 = vmatpush1.msra.mxu0 0.0
        %1125 = vmatprep.subr.mxu0 0.0
        %1126 = vmatpush1.msra.mxu0 %v1067
        %1127 = vmatprep.subr.mxu0 0.0
        %1128 = vmatpush2.msra.mxu0 0.0
        %1129 = vmatprep.subr.mxu0 0.0
        %1130 = vmatpush2.msra.mxu0 0.0
        %1131 = vmatprep.subr.mxu0 0.0
        %1132 = vmatpush2.msra.mxu0 0.0
        %1133 = vmatprep.subr.mxu0 0.0
        %1134 = vmatpush2.msra.mxu0 0.0
        %1135 = vmatprep.subr.mxu0 0.0
        %1136 = vmatpush2.msra.mxu0 0.0
        %1137 = vmatprep.subr.mxu0 0.0
        %1138 = vmatpush2.msra.mxu0 0.0
        %1139 = vmatprep.subr.mxu0 0.0
        %1140 = vmatpush2.msra.mxu0 0.0
        %1141 = vmatprep.subr.mxu0 0.0
        %1142 = vmatpush2.msra.mxu0 0.0
        %1143 = vmatprep.subr.mxu0 0.0
        %1144 = vmatpush2.msra.mxu0 0.0
        %1145 = vmatprep.subr.mxu0 0.0
        %1146 = vmatpush2.msra.mxu0 0.0
        %1147 = vmatprep.subr.mxu0 0.0
        %1148 = vmatpush2.msra.mxu0 0.0
        %1149 = vmatprep.subr.mxu0 0.0
        %1150 = vmatpush2.msra.mxu0 0.0
        %1151 = vmatprep.subr.mxu0 0.0
        %1152 = vmatpush2.msra.mxu0 0.0
        %1153 = vmatprep.subr.mxu0 0.0
        %1154 = vmatpush2.msra.mxu0 0.0
        %1155 = vmatprep.subr.mxu0 0.0
        %1156 = vmatpush2.msra.mxu0 0.0
        %1157 = vmatprep.subr.mxu0 0.0
        %1158 = vmatpush2.msra.mxu0 0.0
        %1159 = vmatprep.mubr.f32.mxu0 0.0
        %1160 = vmatmul.mubr.f32.gmra.mxu0 %v1090
        %v1161 = vpop.f32.mrf.mxu0
        %v1162 = vadd.f32 0.0, %v1161
        %v1163 = vpop.f32.mrf.mxu0
        %1164 = vmatprep.mubr.f32.mxu0 0.0
        %1165 = vmatmul.mubr.f32.gmra.mxu0 %v1093
        %v1166 = vpop.f32.mrf.mxu0
        %v1167 = vadd.f32 0.0, %v1166
        %v1168 = vpop.f32.mrf.mxu0
        %1169 = vdwg.mxu0
        %v1170 = vadd.f32 %v1087, %v1162
        %v1171 = vadd.f32 %v1088, %v1167
        %1172 = vst.msk [vmem:[%s1078] sm:$0xff] %vm811, %v1170
        %1173 = vst.msk [vmem:[%s1078 + $0x8] sm:$0xff] %vm811, %v1171
        %1174 = vst.msk [vmem:[%s1044] sm:$0x1] %vm841, %v1055
        // Predicated region
        $region57: #{tpu_custom_call.1} parent=51 // pred_check
          %p1175 = pneg %p361
        $region58: #{tpu_custom_call.1} parent=51 // pred_check_branch
          %1177 = sbr.rel (%p1175) target = $region60
        $region59: #{tpu_custom_call.1} parent=51 // pred_region
          %v1178 = vld [vmem:[#allocation4] sm:$0x1]
          %v1179 = vld [vmem:[#allocation4 + $0x1] sm:$0x1]
          %v1180 = vrcp.pop %v1178
          %v1181 = vrcp.pop %v1179
          %v1182 = vld [vmem:[#allocation5] sm:$0xff]
          %v1183 = vld [vmem:[#allocation5 + $0x8] sm:$0xff]
          %v1184 = vld [vmem:[#allocation5 + $0x10] sm:$0xff]
          %v1185 = vld [vmem:[#allocation5 + $0x18] sm:$0xff]
          %v1188 = vlaneseq
          %v1189 = vshrl.u32 %v1188, 7
          %v1190 = vsub.s32 0, %v1189
          %v1191 = vrot.slane %v1180, %v1190
          %v1192 = vlaneseq
          %v1193 = vshrl.u32 %v1192, 7
          %v1194 = vsub.s32 0, %v1193
          %v1195 = vrot.slane %v1181, %v1194
          %v1198 = vmul.f32 %v1182, %v1191
          %v1199 = vmul.f32 %v1183, %v1191
          %v1200 = vmul.f32 %v1184, %v1195
          %v1201 = vmul.f32 %v1185, %v1195
          %v1202 = vld [vmem:[%s6] sm:$0xff]
          %v1203 = vld [vmem:[%s6 + $0x8] sm:$0xff]
          %v1204 = vld [vmem:[%s6 + $0x10] sm:$0xff]
          %v1205 = vld [vmem:[%s6 + $0x18] sm:$0xff]
          %v1206 = vld [vmem:[%s7] sm:$0x1]
          %v1208 = vlaneseq
          %v1209 = vshrl.u32 %v1208, 7
          %v1210 = vsub.s32 0, %v1209
          %v1211 = vrot.slane %v1206, %v1210
          %1213 = vxpose.xlu0.b32.start [1/16] %v1198, 128
          %1214 = vxpose.xlu0.b32.cont [2/16] %v1199, 128
          %1215 = vxpose.xlu0.b32.cont [3/16] %v1200, 128
          %1216 = vxpose.xlu0.b32.cont [4/16] %v1201, 128
          %1217 = vxpose.xlu0.b32.cont [5/16] 0.0, 128
          %1218 = vxpose.xlu0.b32.cont [6/16] 0.0, 128
          %1219 = vxpose.xlu0.b32.cont [7/16] 0.0, 128
          %1220 = vxpose.xlu0.b32.cont [8/16] 0.0, 128
          %1221 = vxpose.xlu0.b32.cont [9/16] 0.0, 128
          %1222 = vxpose.xlu0.b32.cont [10/16] 0.0, 128
          %1223 = vxpose.xlu0.b32.cont [11/16] 0.0, 128
          %1224 = vxpose.xlu0.b32.cont [12/16] 0.0, 128
          %1225 = vxpose.xlu0.b32.cont [13/16] 0.0, 128
          %1226 = vxpose.xlu0.b32.cont [14/16] 0.0, 128
          %1227 = vxpose.xlu0.b32.cont [15/16] 0.0, 128
          %1228 = vxpose.xlu0.b32.end [16/16] 0.0, 128
          %v1229 = vpop.trf.xlu0
          %v1230 = vpop.trf.xlu0
          %v1231 = vpop.trf.xlu0
          %v1232 = vpop.trf.xlu0
          %v1233 = vpop.trf.xlu0
          %v1234 = vpop.trf.xlu0
          %v1235 = vpop.trf.xlu0
          %v1236 = vpop.trf.xlu0
          %v1237 = vpop.trf.xlu0
          %v1238 = vpop.trf.xlu0
          %v1239 = vpop.trf.xlu0
          %v1240 = vpop.trf.xlu0
          %v1241 = vpop.trf.xlu0
          %v1242 = vpop.trf.xlu0
          %v1243 = vpop.trf.xlu0
          %v1244 = vpop.trf.xlu0
          %v1246 = vsel %vm566, %v1229, 0
          %1248 = vmatprep.subr.mxu0 0.0
          %1249 = vmatpush1.msra.mxu0 0.0
          %1250 = vmatprep.subr.mxu0 0.0
          %1251 = vmatpush1.msra.mxu0 0.0
          %1252 = vmatprep.subr.mxu0 0.0
          %1253 = vmatpush1.msra.mxu0 0.0
          %1254 = vmatprep.subr.mxu0 0.0
          %1255 = vmatpush1.msra.mxu0 0.0
          %1256 = vmatprep.subr.mxu0 0.0
          %1257 = vmatpush1.msra.mxu0 0.0
          %1258 = vmatprep.subr.mxu0 0.0
          %1259 = vmatpush1.msra.mxu0 0.0
          %1260 = vmatprep.subr.mxu0 0.0
          %1261 = vmatpush1.msra.mxu0 0.0
          %1262 = vmatprep.subr.mxu0 0.0
          %1263 = vmatpush1.msra.mxu0 0.0
          %1264 = vmatprep.subr.mxu0 0.0
          %1265 = vmatpush1.msra.mxu0 0.0
          %1266 = vmatprep.subr.mxu0 0.0
          %1267 = vmatpush1.msra.mxu0 0.0
          %1268 = vmatprep.subr.mxu0 0.0
          %1269 = vmatpush1.msra.mxu0 0.0
          %1270 = vmatprep.subr.mxu0 0.0
          %1271 = vmatpush1.msra.mxu0 0.0
          %1272 = vmatprep.subr.mxu0 0.0
          %1273 = vmatpush1.msra.mxu0 %v1205
          %1274 = vmatprep.subr.mxu0 0.0
          %1275 = vmatpush1.msra.mxu0 %v1204
          %1276 = vmatprep.subr.mxu0 0.0
          %1277 = vmatpush1.msra.mxu0 %v1203
          %1278 = vmatprep.subr.mxu0 0.0
          %1279 = vmatpush1.msra.mxu0 %v1202
          %1280 = vmatprep.subr.mxu0 0.0
          %1281 = vmatpush2.msra.mxu0 0.0
          %1282 = vmatprep.subr.mxu0 0.0
          %1283 = vmatpush2.msra.mxu0 0.0
          %1284 = vmatprep.subr.mxu0 0.0
          %1285 = vmatpush2.msra.mxu0 0.0
          %1286 = vmatprep.subr.mxu0 0.0
          %1287 = vmatpush2.msra.mxu0 0.0
          %1288 = vmatprep.subr.mxu0 0.0
          %1289 = vmatpush2.msra.mxu0 0.0
          %1290 = vmatprep.subr.mxu0 0.0
          %1291 = vmatpush2.msra.mxu0 0.0
          %1292 = vmatprep.subr.mxu0 0.0
          %1293 = vmatpush2.msra.mxu0 0.0
          %1294 = vmatprep.subr.mxu0 0.0
          %1295 = vmatpush2.msra.mxu0 0.0
          %1296 = vmatprep.subr.mxu0 0.0
          %1297 = vmatpush2.msra.mxu0 0.0
          %1298 = vmatprep.subr.mxu0 0.0
          %1299 = vmatpush2.msra.mxu0 0.0
          %1300 = vmatprep.subr.mxu0 0.0
          %1301 = vmatpush2.msra.mxu0 0.0
          %1302 = vmatprep.subr.mxu0 0.0
          %1303 = vmatpush2.msra.mxu0 0.0
          %1304 = vmatprep.subr.mxu0 0.0
          %1305 = vmatpush2.msra.mxu0 0.0
          %1306 = vmatprep.subr.mxu0 0.0
          %1307 = vmatpush2.msra.mxu0 0.0
          %1308 = vmatprep.subr.mxu0 0.0
          %1309 = vmatpush2.msra.mxu0 0.0
          %1310 = vmatprep.subr.mxu0 0.0
          %1311 = vmatpush2.msra.mxu0 0.0
          %1312 = vmatprep.mubr.f32.mxu0 0.0
          %1313 = vmatmul.mubr.f32.gmra.mxu0 %v1246
          %v1314 = vpop.f32.mrf.mxu0
          %v1315 = vadd.f32 %v1211, %v1314
          %v1316 = vpop.f32.mrf.mxu0
          %1317 = vdwg.mxu0
          %1318 = vst.msk [vmem:[%s346] sm:$0xff] %vm566, %v1315
        $region60: #{tpu_custom_call.1} parent=51 // pred_fallthru
          _
        %s1319 = sand.u32 %s233, 1
        %s1320 = scalar_lea.sflag [#allocation7], %s1319
        %s1321 = sand.u32 %s233, 1
        %s1322 = smul.addr %s1321, 8
        %s1323 = scalar_lea.vmem [#allocation6], %s1322
        // Predicated region
        $region61: #{tpu_custom_call.1} parent=51 // pred_check
          %p1324 = pneg %p243
        $region62: #{tpu_custom_call.1} parent=51 // pred_check_branch
          %1326 = sbr.rel (%p1324) target = $region64
        $region63: #{tpu_custom_call.1} parent=51 // pred_region
          %s1328 = ssub.s32 128, 128
          %1329 = vsyncadd %s1320, %s1328
          %s1330 = sadd.s32 %s28, %s27
          %s1331 = smul.addr %s1330, 128
          %s1332 = scalar_lea.hbm %s8, %s1331
          %s1334 = sshll.u32 %s1323, 4
          %s1335 = int_to_ptr.vmem [resolvable:$true] %s1334
          %1337 = dma.vmem_to_hbm [thread:$0]  %s1335, 128, %s1332, %s1320
        $region64: #{tpu_custom_call.1} parent=51 // pred_fallthru
          _
      $region52: #{tpu_custom_call.1} parent=5 // pred_fallthru
        _
      %p1338 = scmp.le.s32.totalorder 2, %s17
      // Predicated region
      $region65: #{tpu_custom_call.1} parent=5 // pred_check
        %p1339 = pneg %p1338
      $region66: #{tpu_custom_call.1} parent=5 // pred_check_branch
        %1341 = sbr.rel (%p1339) target = $region68
      $region67: #{tpu_custom_call.1} parent=5 // pred_region
        %s1342 = ssub.s32 %s17, 2
        // Predicated region
        $region69: #{tpu_custom_call.1} parent=67 // pred_check
          %p1343 = pneg %p249
        $region70: #{tpu_custom_call.1} parent=67 // pred_check_branch
          %1345 = sbr.rel (%p1343) target = $region72
        $region71: #{tpu_custom_call.1} parent=67 // pred_region
          %s1346 = sand.u32 %s234, 1
          %s1347 = scalar_lea.sflag [#allocation7], %s1346
          %s1348 = sand.u32 %s234, 1
          %s1349 = smul.addr %s1348, 8
          %s1350 = scalar_lea.vmem [#allocation6], %s1349
          %1351 = dma.done %s1347, 128
        $region72: #{tpu_custom_call.1} parent=67 // pred_fallthru
          _
      $region68: #{tpu_custom_call.1} parent=5 // pred_fallthru
        _
    $region6: #{tpu_custom_call.1} parent=1 // loop_footer
      %s21 = sadd.s32 1, %s17
    $region7: #{tpu_custom_call.1} parent=1 // loop_footer_branch
      %16 = sbr.rel target = $region3
    $region8: #{tpu_custom_call.1} parent=1 // loop_exit
      _
    %1352 = vsyncpa [#allocation7], 1
    %s1353 = scalar_lea.sflag [#allocation7], 1
    %1354 = vsyncpa %s1353, 1

</llo_original>
